<compile_context>
chip_gen: v7x
topology: tpu7x:2x2x1
jax: 0.10.0
libtpu: 0.0.40
codegen_flags: <defaults>
</compile_context>

<pallas_src>
import functools

import jax
import jax.numpy as jnp
import numpy as np
from jax.experimental import pallas as pl
from jax.experimental.pallas import tpu as pltpu


# ----------------------------- Pallas kernel --------------------------------


def cnn_kernel(x_ref, edges_ref, w1_ref, b1_ref, w2_ref, b2_ref, w3_ref, b3_ref,
               fw1_ref, fb1_ref, fw2_ref, fb2_ref, o_ref,
               s_shift, s_pool, *, Bt, L):
    """Whole network for Bt samples, stacked batch-major on sublanes."""
    Lp = L // 8
    H1 = fw1_ref.shape[1]                      # 625

    def taps(h, M, C, mask_col):
        # Stage h at rows [8 : M+8) of s_shift and read the +/-1 shifted views.
        # Rows that would leak across sample boundaries (or read the
        # uninitialized pad rows) are zeroed with precomputed edge masks, which
        # reproduces Conv1d's padding=1 per sample.
        s_shift[8:M + 8, 0:C] = h
        prev = s_shift[7:M + 7, 0:C]           # row r -> h[r-1]
        nxt = s_shift[9:M + 9, 0:C]            # row r -> h[r+1]
        first = edges_ref[0:M, mask_col:mask_col + 1]
        last = edges_ref[0:M, mask_col + 1:mask_col + 2]
        prev = jnp.where(first > 0.0, 0.0, prev)
        nxt = jnp.where(last > 0.0, 0.0, nxt)
        return prev, nxt

    def pool2(M, C):
        # MaxPool1d(2,2): pairwise max of even/odd rows via stride-2 reads.
        return jnp.maximum(s_pool[pl.ds(0, M // 2, stride=2), 0:C],
                           s_pool[pl.ds(1, M // 2, stride=2), 0:C])

    # ---- layer 1: Conv1d(1->32, k=3, p=1) + ReLU + MaxPool (C_in=1 -> VPU FMAs)
    M0 = Bt * L
    x = x_ref[...]                              # (M0, 1) batch-major stacked column
    prev, nxt = taps(x, M0, 1, 0)
    w1 = w1_ref[...]                            # (3, 32), row k = tap k
    acc = prev * w1[0:1, :] + x * w1[1:2, :] + nxt * w1[2:3, :]
    acc = jnp.maximum(acc + b1_ref[...], 0.0)   # (M0, 32)
    s_pool[0:M0, 0:32] = acc
    h = pool2(M0, 32)                           # (M0//2, 32)

    # ---- layer 2: Conv1d(32->64) + ReLU + MaxPool (per-tap MXU matmuls)
    M1 = M0 // 2
    prev, nxt = taps(h, M1, 32, 2)
    acc = (jnp.dot(prev, w2_ref[0:32, :], preferred_element_type=jnp.float32)
           + jnp.dot(h, w2_ref[32:64, :], preferred_element_type=jnp.float32)
           + jnp.dot(nxt, w2_ref[64:96, :], preferred_element_type=jnp.float32))
    acc = jnp.maximum(acc + b2_ref[...], 0.0)   # (M1, 64)
    s_pool[0:M1, 0:64] = acc
    h = pool2(M1, 64)                           # (M1//2, 64)

    # ---- layer 3: Conv1d(64->128) + ReLU; its MaxPool is fused into the fc1 loop
    M2 = M1 // 2
    prev, nxt = taps(h, M2, 64, 4)
    acc = (jnp.dot(prev, w3_ref[0:64, :], preferred_element_type=jnp.float32)
           + jnp.dot(h, w3_ref[64:128, :], preferred_element_type=jnp.float32)
           + jnp.dot(nxt, w3_ref[128:192, :], preferred_element_type=jnp.float32))
    acc = jnp.maximum(acc + b3_ref[...], 0.0)   # (M2, 128)
    s_pool[0:M2, 0:128] = acc

    # ---- fc1 as an accumulated per-position matmul (no sublane->lane flatten),
    #      with layer-3 pooling fused: h_l[b,:] = max(acc3[b,2l], acc3[b,2l+1]).
    z = jnp.zeros((Bt, H1), jnp.float32)
    for l in range(Lp):
        hl = jnp.maximum(s_pool[pl.ds(2 * l, Bt, stride=2 * Lp), 0:128],
                         s_pool[pl.ds(2 * l + 1, Bt, stride=2 * Lp), 0:128])
        z = z + jnp.dot(hl, fw1_ref[l * 128:(l + 1) * 128, :],
                        preferred_element_type=jnp.float32)
    z = jnp.maximum(z + fb1_ref[...], 0.0)
    # TODO(synk): nn.Dropout(p=0.5) is stochastic; applied as identity (eval mode).
    out = jnp.dot(z, fw2_ref[...], preferred_element_type=jnp.float32)
    o_ref[...] = (out + fb2_ref[...]).astype(o_ref.dtype)


# --------------------------- one-time param prep -----------------------------


def prepare_params(params, num_classes, Bt):
    """Hoisted out of the per-call path: run once at parameter-load time."""
    (w1, b1, w2, b2, w3, b3, fw1, fb1, fw2, fb2) = params
    H1, F = fw1.shape                       # 625, 128 * Lp
    Lp = F // 128
    L = Lp * 8
    ncp = pl.cdiv(num_classes, 128) * 128   # lane-dense FC2 output width

    def conv_w(w):
        c_out, c_in, k = w.shape
        # tap-major rows: row k*C_in + i = w[:, i, k]  ->  (3*C_in, C_out)
        return jnp.transpose(w, (2, 1, 0)).reshape(k * c_in, c_out).astype(jnp.float32)

    w1k, w2k, w3k = conv_w(w1), conv_w(w2), conv_w(w3)
    b1r, b2r, b3r = b1[None, :], b2[None, :], b3[None, :]

    # fc1: torch flatten is channel-major (c*Lp + l); the kernel consumes
    # per-position row blocks (l*128 + c).  Permute once here.
    fw1k = jnp.transpose(fw1.reshape(H1, 128, Lp), (2, 1, 0)).reshape(Lp * 128, H1)
    fb1r = fb1[None, :]

    # fc2: transpose + zero-pad to a lane-dense 128-wide output block.
    fw2k = jnp.zeros((H1, ncp), jnp.float32).at[:, :num_classes].set(fw2.T)
    fb2r = jnp.zeros((1, ncp), jnp.float32).at[:, :num_classes].set(fb2[None, :])

    # Precomputed sample-boundary masks for the 3 conv layers (cols 2k, 2k+1).
    M0 = Bt * L
    e = np.zeros((M0, 8), np.float32)
    for k, N in enumerate((L, L // 2, L // 4)):
        M = Bt * N
        r = np.arange(M)
        e[:M, 2 * k] = (r % N == 0).astype(np.float32)        # first row of sample
        e[:M, 2 * k + 1] = (r % N == N - 1).astype(np.float32)  # last row of sample
    edges = jnp.asarray(e)

    return (edges, w1k, b1r, w2k, b2r, w3k, b3r, fw1k, fb1r, fw2k, fb2r)


# ------------------------------ Python wrapper -------------------------------


def cnn_forward(x, prep, num_classes, Bt=8):
    """x: (B, 1, L) float32 -> (B, num_classes) float32."""
    (edges, w1k, b1r, w2k, b2r, w3k, b3r, fw1k, fb1r, fw2k, fb2r) = prep
    B, c0, L = x.shape
    assert c0 == 1 and L % 8 == 0 and Bt % 8 == 0
    assert edges.shape[0] == Bt * L
    ncp = fw2k.shape[1]
    B_pad = pl.cdiv(B, Bt) * Bt

    # Batch-major stacked column: row b*L + l = x[b, 0, l].  (Kept as a (M,1)
    # column in HBM so the kernel needs no lane->sublane relayout of x.)
    x2 = x[:, 0, :].astype(jnp.float32)
    if B_pad != B:
        x2 = jnp.concatenate([x2, jnp.zeros((B_pad - B, L), jnp.float32)], axis=0)
    x_col = x2.reshape(B_pad * L, 1)

    const = lambda i: (0, 0)
    out = pl.pallas_call(
        functools.partial(cnn_kernel, Bt=Bt, L=L),
        out_shape=jax.ShapeDtypeStruct((B_pad, ncp), jnp.float32),
        grid=(B_pad // Bt,),
        in_specs=[
            pl.BlockSpec((Bt * L, 1), lambda i: (i, 0)),
            pl.BlockSpec(edges.shape, const),
            pl.BlockSpec(w1k.shape, const),
            pl.BlockSpec(b1r.shape, const),
            pl.BlockSpec(w2k.shape, const),
            pl.BlockSpec(b2r.shape, const),
            pl.BlockSpec(w3k.shape, const),
            pl.BlockSpec(b3r.shape, const),
            pl.BlockSpec(fw1k.shape, const),
            pl.BlockSpec(fb1r.shape, const),
            pl.BlockSpec(fw2k.shape, const),
            pl.BlockSpec(fb2r.shape, const),
        ],
        out_specs=pl.BlockSpec((Bt, ncp), lambda i: (i, 0)),
        scratch_shapes=[
            pltpu.VMEM((Bt * L + 16, 128), jnp.float32),   # conv-tap staging
            pltpu.VMEM((Bt * L, 128), jnp.float32),        # conv/pool staging
        ],
        compiler_params=pltpu.CompilerParams(
            dimension_semantics=("parallel",),
            vmem_limit_bytes=48 * 1024 * 1024,
        ),
    )(x_col, edges, w1k, b1r, w2k, b2r, w3k, b3r, fw1k, fb1r, fw2k, fb2r)

    return out[:B, :num_classes]


# ----------------------------- reference (JAX) -------------------------------


def ref_forward(x, params):
    (w1, b1, w2, b2, w3, b3, fw1, fb1, fw2, fb2) = params

    def conv_block(h, w, b):
        L = h.shape[-1]
        hp = jnp.pad(h, ((0, 0), (0, 0), (1, 1)))
        out = jnp.zeros((h.shape[0], w.shape[0], L), jnp.float32)
        for k in range(3):
            out = out + jnp.einsum('oi,bil->bol', w[:, :, k], hp[:, :, k:k + L])
        out = jnp.maximum(out + b[None, :, None], 0.0)
        return out.reshape(out.shape[0], out.shape[1], L // 2, 2).max(axis=-1)

    h = conv_block(x, w1, b1)
    h = conv_block(h, w2, b2)
    h = conv_block(h, w3, b3)
    f = h.reshape(h.shape[0], -1)
    h = jnp.maximum(f @ fw1.T + fb1, 0.0)
    return h @ fw2.T + fb2


# ---------------------------------- main -------------------------------------


def xavier_uniform(key, shape):
    fan_out, fan_in = shape
    limit = np.sqrt(6.0 / (fan_in + fan_out))
    return jax.random.uniform(key, shape, jnp.float32, -limit, limit)


if __name__ == "__main__":
    B = 2
    input_size = 16          # L (must be divisible by 8)
    num_classes = 10
    Lp = input_size // 8
    Bt = 8                   # samples per grid step (multiple of 8)

    key = jax.random.PRNGKey(0)
    ks = jax.random.split(key, 12)

    # Conv weights in PyTorch layout (C_out, C_in, K); deterministic synthetic init.
    w1 = 0.3 * jax.random.normal(ks[0], (32, 1, 3), jnp.float32)
    b1 = 0.1 * jax.random.normal(ks[1], (32,), jnp.float32)
    w2 = 0.1 * jax.random.normal(ks[2], (64, 32, 3), jnp.float32)
    b2 = 0.1 * jax.random.normal(ks[3], (64,), jnp.float32)
    w3 = 0.05 * jax.random.normal(ks[4], (128, 64, 3), jnp.float32)
    b3 = 0.1 * jax.random.normal(ks[5], (128,), jnp.float32)
    fw1 = xavier_uniform(ks[6], (625, Lp * 128))
    fb1 = 0.1 * jax.random.normal(ks[7], (625,), jnp.float32)
    fw2 = xavier_uniform(ks[8], (num_classes, 625))
    fb2 = 0.1 * jax.random.normal(ks[9], (num_classes,), jnp.float32)

    params = (w1, b1, w2, b2, w3, b3, fw1, fb1, fw2, fb2)
    prep = prepare_params(params, num_classes, Bt)   # one-time weight reshuffle

    x = jax.random.normal(ks[10], (B, 1, input_size), jnp.float32)

    out = cnn_forward(x, prep, num_classes, Bt=Bt)
    out = jax.block_until_ready(out)

    ref = ref_forward(x, params)
    np.testing.assert_allclose(np.asarray(out), np.asarray(ref),
                               rtol=1e-4, atol=1e-4)
    assert out.shape == (B, num_classes)
    print("KERNEL_OK")
</pallas_src>

<mosaic_0001>
module attributes {stable_mosaic.version = 11 : i64} {
  func.func @cnn_kernel(%arg0: i32, %arg1: memref<128x1xf32, #tpu.memory_space<vmem>>, %arg2: memref<128x8xf32, #tpu.memory_space<vmem>>, %arg3: memref<3x32xf32, #tpu.memory_space<vmem>>, %arg4: memref<1x32xf32, #tpu.memory_space<vmem>>, %arg5: memref<96x64xf32, #tpu.memory_space<vmem>>, %arg6: memref<1x64xf32, #tpu.memory_space<vmem>>, %arg7: memref<192x128xf32, #tpu.memory_space<vmem>>, %arg8: memref<1x128xf32, #tpu.memory_space<vmem>>, %arg9: memref<256x625xf32, #tpu.memory_space<vmem>>, %arg10: memref<1x625xf32, #tpu.memory_space<vmem>>, %arg11: memref<625x128xf32, #tpu.memory_space<vmem>>, %arg12: memref<1x128xf32, #tpu.memory_space<vmem>>, %arg13: memref<8x128xf32, #tpu.memory_space<vmem>>, %arg14: memref<144x128xf32, #tpu.memory_space<vmem>>, %arg15: memref<128x128xf32, #tpu.memory_space<vmem>>) attributes {dimension_semantics = [#tpu.dimension_semantics<parallel>], iteration_bounds = array<i64: 1>, scalar_prefetch = 0 : i64, scratch_operands = 2 : i64, tpu.core_type = #tpu.core_type<tc>, window_params = [{transform_indices = @transform_0, window_bounds = array<i64: 128, 1>}, {pipeline_mode = #tpu.pipeline_mode<synchronous>, transform_indices = @transform_1, window_bounds = array<i64: 128, 8>}, {pipeline_mode = #tpu.pipeline_mode<synchronous>, transform_indices = @transform_2, window_bounds = array<i64: 3, 32>}, {pipeline_mode = #tpu.pipeline_mode<synchronous>, transform_indices = @transform_3, window_bounds = array<i64: 1, 32>}, {pipeline_mode = #tpu.pipeline_mode<synchronous>, transform_indices = @transform_4, window_bounds = array<i64: 96, 64>}, {pipeline_mode = #tpu.pipeline_mode<synchronous>, transform_indices = @transform_5, window_bounds = array<i64: 1, 64>}, {pipeline_mode = #tpu.pipeline_mode<synchronous>, transform_indices = @transform_6, window_bounds = array<i64: 192, 128>}, {pipeline_mode = #tpu.pipeline_mode<synchronous>, transform_indices = @transform_7, window_bounds = array<i64: 1, 128>}, {pipeline_mode = #tpu.pipeline_mode<synchronous>, transform_indices = @transform_8, window_bounds = array<i64: 256, 625>}, {pipeline_mode = #tpu.pipeline_mode<synchronous>, transform_indices = @transform_9, window_bounds = array<i64: 1, 625>}, {pipeline_mode = #tpu.pipeline_mode<synchronous>, transform_indices = @transform_10, window_bounds = array<i64: 625, 128>}, {pipeline_mode = #tpu.pipeline_mode<synchronous>, transform_indices = @transform_11, window_bounds = array<i64: 1, 128>}, {transform_indices = @transform_12, window_bounds = array<i64: 8, 128>}]} {
    %c0 = arith.constant 0 : index
    %c0_0 = arith.constant 0 : index
    %0 = vector.load %arg1[%c0, %c0_0] : memref<128x1xf32, #tpu.memory_space<vmem>>, vector<128x1xf32>
    %c8 = arith.constant 8 : index
    %c0_1 = arith.constant 0 : index
    %1 = vector.load %arg14[%c8, %c0_1] : memref<144x128xf32, #tpu.memory_space<vmem>>, vector<128x1xf32>
    tpu.vector_store %arg14[%c8, %c0_1], %0 {strides = array<i32>} : memref<144x128xf32, #tpu.memory_space<vmem>>, vector<128x1xf32>,
    %c7 = arith.constant 7 : index
    %c0_2 = arith.constant 0 : index
    %2 = vector.load %arg14[%c7, %c0_2] : memref<144x128xf32, #tpu.memory_space<vmem>>, vector<128x1xf32>
    %c9 = arith.constant 9 : index
    %c0_3 = arith.constant 0 : index
    %3 = vector.load %arg14[%c9, %c0_3] : memref<144x128xf32, #tpu.memory_space<vmem>>, vector<128x1xf32>
    %c0_4 = arith.constant 0 : index
    %c0_5 = arith.constant 0 : index
    %4 = vector.load %arg2[%c0_4, %c0_5] : memref<128x8xf32, #tpu.memory_space<vmem>>, vector<128x1xf32>
    %c0_6 = arith.constant 0 : index
    %c1 = arith.constant 1 : index
    %5 = vector.load %arg2[%c0_6, %c1] : memref<128x8xf32, #tpu.memory_space<vmem>>, vector<128x1xf32>
    %cst = arith.constant 0.000000e+00 : f32
    %6 = vector.broadcast %cst : f32 to vector<128x1xf32>
    %7 = arith.cmpf ogt, %4, %6 : vector<128x1xf32>
    %cst_7 = arith.constant 0.000000e+00 : f32
    %8 = vector.broadcast %cst_7 : f32 to vector<128x1xf32>
    %9 = arith.select %7, %8, %2 : vector<128x1xi1>, vector<128x1xf32>
    %cst_8 = arith.constant 0.000000e+00 : f32
    %10 = vector.broadcast %cst_8 : f32 to vector<128x1xf32>
    %11 = arith.cmpf ogt, %5, %10 : vector<128x1xf32>
    %cst_9 = arith.constant 0.000000e+00 : f32
    %12 = vector.broadcast %cst_9 : f32 to vector<128x1xf32>
    %13 = arith.select %11, %12, %3 : vector<128x1xi1>, vector<128x1xf32>
    %c0_10 = arith.constant 0 : index
    %c0_11 = arith.constant 0 : index
    %14 = vector.load %arg3[%c0_10, %c0_11] : memref<3x32xf32, #tpu.memory_space<vmem>>, vector<3x32xf32>
    %15 = vector.extract_strided_slice %14 {offsets = [0, 0], sizes = [1, 32], strides = [1, 1]} : vector<3x32xf32> to vector<1x32xf32>
    %16 = vector.broadcast %9 : vector<128x1xf32> to vector<128x32xf32>
    %17 = vector.broadcast %15 : vector<1x32xf32> to vector<128x32xf32>
    %18 = arith.mulf %16, %17 : vector<128x32xf32>
    %19 = vector.extract_strided_slice %14 {offsets = [1, 0], sizes = [1, 32], strides = [1, 1]} : vector<3x32xf32> to vector<1x32xf32>
    %20 = vector.broadcast %0 : vector<128x1xf32> to vector<128x32xf32>
    %21 = vector.broadcast %19 : vector<1x32xf32> to vector<128x32xf32>
    %22 = arith.mulf %20, %21 : vector<128x32xf32>
    %23 = arith.addf %18, %22 : vector<128x32xf32>
    %24 = vector.extract_strided_slice %14 {offsets = [2, 0], sizes = [1, 32], strides = [1, 1]} : vector<3x32xf32> to vector<1x32xf32>
    %25 = vector.broadcast %13 : vector<128x1xf32> to vector<128x32xf32>
    %26 = vector.broadcast %24 : vector<1x32xf32> to vector<128x32xf32>
    %27 = arith.mulf %25, %26 : vector<128x32xf32>
    %28 = arith.addf %23, %27 : vector<128x32xf32>
    %c0_12 = arith.constant 0 : index
    %c0_13 = arith.constant 0 : index
    %29 = vector.load %arg4[%c0_12, %c0_13] : memref<1x32xf32, #tpu.memory_space<vmem>>, vector<1x32xf32>
    %30 = vector.broadcast %29 : vector<1x32xf32> to vector<128x32xf32>
    %31 = arith.addf %28, %30 : vector<128x32xf32>
    %cst_14 = arith.constant 0.000000e+00 : f32
    %32 = vector.broadcast %cst_14 : f32 to vector<128x32xf32>
    %33 = arith.maximumf %31, %32 : vector<128x32xf32>
    %c0_15 = arith.constant 0 : index
    %c0_16 = arith.constant 0 : index
    %34 = vector.load %arg15[%c0_15, %c0_16] : memref<128x128xf32, #tpu.memory_space<vmem>>, vector<128x32xf32>
    tpu.vector_store %arg15[%c0_15, %c0_16], %33 {strides = array<i32>} : memref<128x128xf32, #tpu.memory_space<vmem>>, vector<128x32xf32>,
    %c0_17 = arith.constant 0 : index
    %c0_18 = arith.constant 0 : index
    %35 = tpu.strided_load %arg15[%c0_17, %c0_18] {strides = array<i32: 2, 1>} : memref<128x128xf32, #tpu.memory_space<vmem>>, vector<64x32xf32>
    %c1_19 = arith.constant 1 : index
    %c0_20 = arith.constant 0 : index
    %36 = tpu.strided_load %arg15[%c1_19, %c0_20] {strides = array<i32: 2, 1>} : memref<128x128xf32, #tpu.memory_space<vmem>>, vector<64x32xf32>
    %37 = arith.maximumf %35, %36 : vector<64x32xf32>
    %c8_21 = arith.constant 8 : index
    %c0_22 = arith.constant 0 : index
    %38 = vector.load %arg14[%c8_21, %c0_22] : memref<144x128xf32, #tpu.memory_space<vmem>>, vector<64x32xf32>
    tpu.vector_store %arg14[%c8_21, %c0_22], %37 {strides = array<i32>} : memref<144x128xf32, #tpu.memory_space<vmem>>, vector<64x32xf32>,
    %c7_23 = arith.constant 7 : index
    %c0_24 = arith.constant 0 : index
    %39 = vector.load %arg14[%c7_23, %c0_24] : memref<144x128xf32, #tpu.memory_space<vmem>>, vector<64x32xf32>
    %c9_25 = arith.constant 9 : index
    %c0_26 = arith.constant 0 : index
    %40 = vector.load %arg14[%c9_25, %c0_26] : memref<144x128xf32, #tpu.memory_space<vmem>>, vector<64x32xf32>
    %c0_27 = arith.constant 0 : index
    %c2 = arith.constant 2 : index
    %41 = vector.load %arg2[%c0_27, %c2] : memref<128x8xf32, #tpu.memory_space<vmem>>, vector<64x1xf32>
    %c0_28 = arith.constant 0 : index
    %c3 = arith.constant 3 : index
    %42 = vector.load %arg2[%c0_28, %c3] : memref<128x8xf32, #tpu.memory_space<vmem>>, vector<64x1xf32>
    %cst_29 = arith.constant 0.000000e+00 : f32
    %43 = vector.broadcast %cst_29 : f32 to vector<64x1xf32>
    %44 = arith.cmpf ogt, %41, %43 : vector<64x1xf32>
    %cst_30 = arith.constant 0.000000e+00 : f32
    %45 = vector.shape_cast %44 : vector<64x1xi1> to vector<64x1xi1>
    %46 = vector.broadcast %45 : vector<64x1xi1> to vector<64x32xi1>
    %47 = vector.broadcast %cst_30 : f32 to vector<64x32xf32>
    %48 = arith.select %46, %47, %39 : vector<64x32xi1>, vector<64x32xf32>
    %cst_31 = arith.constant 0.000000e+00 : f32
    %49 = vector.broadcast %cst_31 : f32 to vector<64x1xf32>
    %50 = arith.cmpf ogt, %42, %49 : vector<64x1xf32>
    %cst_32 = arith.constant 0.000000e+00 : f32
    %51 = vector.shape_cast %50 : vector<64x1xi1> to vector<64x1xi1>
    %52 = vector.broadcast %51 : vector<64x1xi1> to vector<64x32xi1>
    %53 = vector.broadcast %cst_32 : f32 to vector<64x32xf32>
    %54 = arith.select %52, %53, %40 : vector<64x32xi1>, vector<64x32xf32>
    %c0_33 = arith.constant 0 : index
    %c0_34 = arith.constant 0 : index
    %55 = vector.load %arg5[%c0_33, %c0_34] : memref<96x64xf32, #tpu.memory_space<vmem>>, vector<32x64xf32>
    %cst_35 = arith.constant dense<0.000000e+00> : vector<64x64xf32>
    %56 = tpu.matmul %48, %55, %cst_35 {dimension_numbers = #tpu.dot_dimension_numbers<[1], [0], [0], [1], [0, 0, 1, 1], [], []>} : vector<64x32xf32>, vector<32x64xf32>, vector<64x64xf32> -> vector<64x64xf32>
    %c32 = arith.constant 32 : index
    %c0_36 = arith.constant 0 : index
    %57 = vector.load %arg5[%c32, %c0_36] : memref<96x64xf32, #tpu.memory_space<vmem>>, vector<32x64xf32>
    %cst_37 = arith.constant dense<0.000000e+00> : vector<64x64xf32>
    %58 = tpu.matmul %37, %57, %cst_37 {dimension_numbers = #tpu.dot_dimension_numbers<[1], [0], [0], [1], [0, 0, 1, 1], [], []>} : vector<64x32xf32>, vector<32x64xf32>, vector<64x64xf32> -> vector<64x64xf32>
    %59 = arith.addf %56, %58 : vector<64x64xf32>
    %c64 = arith.constant 64 : index
    %c0_38 = arith.constant 0 : index
    %60 = vector.load %arg5[%c64, %c0_38] : memref<96x64xf32, #tpu.memory_space<vmem>>, vector<32x64xf32>
    %cst_39 = arith.constant dense<0.000000e+00> : vector<64x64xf32>
    %61 = tpu.matmul %54, %60, %cst_39 {dimension_numbers = #tpu.dot_dimension_numbers<[1], [0], [0], [1], [0, 0, 1, 1], [], []>} : vector<64x32xf32>, vector<32x64xf32>, vector<64x64xf32> -> vector<64x64xf32>
    %62 = arith.addf %59, %61 : vector<64x64xf32>
    %c0_40 = arith.constant 0 : index
    %c0_41 = arith.constant 0 : index
    %63 = vector.load %arg6[%c0_40, %c0_41] : memref<1x64xf32, #tpu.memory_space<vmem>>, vector<1x64xf32>
    %64 = vector.broadcast %63 : vector<1x64xf32> to vector<64x64xf32>
    %65 = arith.addf %62, %64 : vector<64x64xf32>
    %cst_42 = arith.constant 0.000000e+00 : f32
    %66 = vector.broadcast %cst_42 : f32 to vector<64x64xf32>
    %67 = arith.maximumf %65, %66 : vector<64x64xf32>
    %c0_43 = arith.constant 0 : index
    %c0_44 = arith.constant 0 : index
    %68 = vector.load %arg15[%c0_43, %c0_44] : memref<128x128xf32, #tpu.memory_space<vmem>>, vector<64x64xf32>
    tpu.vector_store %arg15[%c0_43, %c0_44], %67 {strides = array<i32>} : memref<128x128xf32, #tpu.memory_space<vmem>>, vector<64x64xf32>,
    %c0_45 = arith.constant 0 : index
    %c0_46 = arith.constant 0 : index
    %69 = tpu.strided_load %arg15[%c0_45, %c0_46] {strides = array<i32: 2, 1>} : memref<128x128xf32, #tpu.memory_space<vmem>>, vector<32x64xf32>
    %c1_47 = arith.constant 1 : index
    %c0_48 = arith.constant 0 : index
    %70 = tpu.strided_load %arg15[%c1_47, %c0_48] {strides = array<i32: 2, 1>} : memref<128x128xf32, #tpu.memory_space<vmem>>, vector<32x64xf32>
    %71 = arith.maximumf %69, %70 : vector<32x64xf32>
    %c8_49 = arith.constant 8 : index
    %c0_50 = arith.constant 0 : index
    %72 = vector.load %arg14[%c8_49, %c0_50] : memref<144x128xf32, #tpu.memory_space<vmem>>, vector<32x64xf32>
    tpu.vector_store %arg14[%c8_49, %c0_50], %71 {strides = array<i32>} : memref<144x128xf32, #tpu.memory_space<vmem>>, vector<32x64xf32>,
    %c7_51 = arith.constant 7 : index
    %c0_52 = arith.constant 0 : index
    %73 = vector.load %arg14[%c7_51, %c0_52] : memref<144x128xf32, #tpu.memory_space<vmem>>, vector<32x64xf32>
    %c9_53 = arith.constant 9 : index
    %c0_54 = arith.constant 0 : index
    %74 = vector.load %arg14[%c9_53, %c0_54] : memref<144x128xf32, #tpu.memory_space<vmem>>, vector<32x64xf32>
    %c0_55 = arith.constant 0 : index
    %c4 = arith.constant 4 : index
    %75 = vector.load %arg2[%c0_55, %c4] : memref<128x8xf32, #tpu.memory_space<vmem>>, vector<32x1xf32>
    %c0_56 = arith.constant 0 : index
    %c5 = arith.constant 5 : index
    %76 = vector.load %arg2[%c0_56, %c5] : memref<128x8xf32, #tpu.memory_space<vmem>>, vector<32x1xf32>
    %cst_57 = arith.constant 0.000000e+00 : f32
    %77 = vector.broadcast %cst_57 : f32 to vector<32x1xf32>
    %78 = arith.cmpf ogt, %75, %77 : vector<32x1xf32>
    %cst_58 = arith.constant 0.000000e+00 : f32
    %79 = vector.shape_cast %78 : vector<32x1xi1> to vector<32x1xi1>
    %80 = vector.broadcast %79 : vector<32x1xi1> to vector<32x64xi1>
    %81 = vector.broadcast %cst_58 : f32 to vector<32x64xf32>
    %82 = arith.select %80, %81, %73 : vector<32x64xi1>, vector<32x64xf32>
    %cst_59 = arith.constant 0.000000e+00 : f32
    %83 = vector.broadcast %cst_59 : f32 to vector<32x1xf32>
    %84 = arith.cmpf ogt, %76, %83 : vector<32x1xf32>
    %cst_60 = arith.constant 0.000000e+00 : f32
    %85 = vector.shape_cast %84 : vector<32x1xi1> to vector<32x1xi1>
    %86 = vector.broadcast %85 : vector<32x1xi1> to vector<32x64xi1>
    %87 = vector.broadcast %cst_60 : f32 to vector<32x64xf32>
    %88 = arith.select %86, %87, %74 : vector<32x64xi1>, vector<32x64xf32>
    %c0_61 = arith.constant 0 : index
    %c0_62 = arith.constant 0 : index
    %89 = vector.load %arg7[%c0_61, %c0_62] : memref<192x128xf32, #tpu.memory_space<vmem>>, vector<64x128xf32>
    %cst_63 = arith.constant dense<0.000000e+00> : vector<32x128xf32>
    %90 = tpu.matmul %82, %89, %cst_63 {dimension_numbers = #tpu.dot_dimension_numbers<[1], [0], [0], [1], [0, 0, 1, 1], [], []>} : vector<32x64xf32>, vector<64x128xf32>, vector<32x128xf32> -> vector<32x128xf32>
    %c64_64 = arith.constant 64 : index
    %c0_65 = arith.constant 0 : index
    %91 = vector.load %arg7[%c64_64, %c0_65] : memref<192x128xf32, #tpu.memory_space<vmem>>, vector<64x128xf32>
    %cst_66 = arith.constant dense<0.000000e+00> : vector<32x128xf32>
    %92 = tpu.matmul %71, %91, %cst_66 {dimension_numbers = #tpu.dot_dimension_numbers<[1], [0], [0], [1], [0, 0, 1, 1], [], []>} : vector<32x64xf32>, vector<64x128xf32>, vector<32x128xf32> -> vector<32x128xf32>
    %93 = arith.addf %90, %92 : vector<32x128xf32>
    %c128 = arith.constant 128 : index
    %c0_67 = arith.constant 0 : index
    %94 = vector.load %arg7[%c128, %c0_67] : memref<192x128xf32, #tpu.memory_space<vmem>>, vector<64x128xf32>
    %cst_68 = arith.constant dense<0.000000e+00> : vector<32x128xf32>
    %95 = tpu.matmul %88, %94, %cst_68 {dimension_numbers = #tpu.dot_dimension_numbers<[1], [0], [0], [1], [0, 0, 1, 1], [], []>} : vector<32x64xf32>, vector<64x128xf32>, vector<32x128xf32> -> vector<32x128xf32>
    %96 = arith.addf %93, %95 : vector<32x128xf32>
    %c0_69 = arith.constant 0 : index
    %c0_70 = arith.constant 0 : index
    %97 = vector.load %arg8[%c0_69, %c0_70] : memref<1x128xf32, #tpu.memory_space<vmem>>, vector<1x128xf32>
    %98 = vector.broadcast %97 : vector<1x128xf32> to vector<32x128xf32>
    %99 = arith.addf %96, %98 : vector<32x128xf32>
    %cst_71 = arith.constant 0.000000e+00 : f32
    %100 = vector.broadcast %cst_71 : f32 to vector<32x128xf32>
    %101 = arith.maximumf %99, %100 : vector<32x128xf32>
    %c0_72 = arith.constant 0 : index
    %c0_73 = arith.constant 0 : index
    %102 = vector.load %arg15[%c0_72, %c0_73] : memref<128x128xf32, #tpu.memory_space<vmem>>, vector<32x128xf32>
    tpu.vector_store %arg15[%c0_72, %c0_73], %101 {strides = array<i32>} : memref<128x128xf32, #tpu.memory_space<vmem>>, vector<32x128xf32>,
    %cst_74 = arith.constant 0.000000e+00 : f32
    %103 = vector.broadcast %cst_74 : f32 to vector<8x625xf32>
    %c0_75 = arith.constant 0 : index
    %c0_76 = arith.constant 0 : index
    %104 = tpu.strided_load %arg15[%c0_75, %c0_76] {strides = array<i32: 4, 1>} : memref<128x128xf32, #tpu.memory_space<vmem>>, vector<8x128xf32>
    %c1_77 = arith.constant 1 : index
    %c0_78 = arith.constant 0 : index
    %105 = tpu.strided_load %arg15[%c1_77, %c0_78] {strides = array<i32: 4, 1>} : memref<128x128xf32, #tpu.memory_space<vmem>>, vector<8x128xf32>
    %106 = arith.maximumf %104, %105 : vector<8x128xf32>
    %c0_79 = arith.constant 0 : index
    %c0_80 = arith.constant 0 : index
    %107 = vector.load %arg9[%c0_79, %c0_80] : memref<256x625xf32, #tpu.memory_space<vmem>>, vector<128x625xf32>
    %cst_81 = arith.constant dense<0.000000e+00> : vector<8x625xf32>
    %108 = tpu.matmul %106, %107, %cst_81 {dimension_numbers = #tpu.dot_dimension_numbers<[1], [0], [0], [1], [0, 0, 1, 1], [], []>} : vector<8x128xf32>, vector<128x625xf32>, vector<8x625xf32> -> vector<8x625xf32>
    %109 = arith.addf %103, %108 : vector<8x625xf32>
    %c2_82 = arith.constant 2 : index
    %c0_83 = arith.constant 0 : index
    %110 = tpu.strided_load %arg15[%c2_82, %c0_83] {strides = array<i32: 4, 1>} : memref<128x128xf32, #tpu.memory_space<vmem>>, vector<8x128xf32>
    %c3_84 = arith.constant 3 : index
    %c0_85 = arith.constant 0 : index
    %111 = tpu.strided_load %arg15[%c3_84, %c0_85] {strides = array<i32: 4, 1>} : memref<128x128xf32, #tpu.memory_space<vmem>>, vector<8x128xf32>
    %112 = arith.maximumf %110, %111 : vector<8x128xf32>
    %c128_86 = arith.constant 128 : index
    %c0_87 = arith.constant 0 : index
    %113 = vector.load %arg9[%c128_86, %c0_87] : memref<256x625xf32, #tpu.memory_space<vmem>>, vector<128x625xf32>
    %cst_88 = arith.constant dense<0.000000e+00> : vector<8x625xf32>
    %114 = tpu.matmul %112, %113, %cst_88 {dimension_numbers = #tpu.dot_dimension_numbers<[1], [0], [0], [1], [0, 0, 1, 1], [], []>} : vector<8x128xf32>, vector<128x625xf32>, vector<8x625xf32> -> vector<8x625xf32>
    %115 = arith.addf %109, %114 : vector<8x625xf32>
    %c0_89 = arith.constant 0 : index
    %c0_90 = arith.constant 0 : index
    %116 = vector.load %arg10[%c0_89, %c0_90] : memref<1x625xf32, #tpu.memory_space<vmem>>, vector<1x625xf32>
    %117 = vector.broadcast %116 : vector<1x625xf32> to vector<8x625xf32>
    %118 = arith.addf %115, %117 : vector<8x625xf32>
    %cst_91 = arith.constant 0.000000e+00 : f32
    %119 = vector.broadcast %cst_91 : f32 to vector<8x625xf32>
    %120 = arith.maximumf %118, %119 : vector<8x625xf32>
    %c0_92 = arith.constant 0 : index
    %c0_93 = arith.constant 0 : index
    %121 = vector.load %arg11[%c0_92, %c0_93] : memref<625x128xf32, #tpu.memory_space<vmem>>, vector<625x128xf32>
    %cst_94 = arith.constant dense<0.000000e+00> : vector<8x128xf32>
    %122 = tpu.matmul %120, %121, %cst_94 {dimension_numbers = #tpu.dot_dimension_numbers<[1], [0], [0], [1], [0, 0, 1, 1], [], []>} : vector<8x625xf32>, vector<625x128xf32>, vector<8x128xf32> -> vector<8x128xf32>
    %c0_95 = arith.constant 0 : index
    %c0_96 = arith.constant 0 : index
    %123 = vector.load %arg12[%c0_95, %c0_96] : memref<1x128xf32, #tpu.memory_space<vmem>>, vector<1x128xf32>
    %124 = vector.broadcast %123 : vector<1x128xf32> to vector<8x128xf32>
    %125 = arith.addf %122, %124 : vector<8x128xf32>
    %c0_97 = arith.constant 0 : index
    %c0_98 = arith.constant 0 : index
    %126 = vector.load %arg13[%c0_97, %c0_98] : memref<8x128xf32, #tpu.memory_space<vmem>>, vector<8x128xf32>
    tpu.vector_store %arg13[%c0_97, %c0_98], %125 {strides = array<i32>} : memref<8x128xf32, #tpu.memory_space<vmem>>, vector<8x128xf32>,
    return
  }
  func.func @transform_0(%arg0: i32) -> (i32, i32) {
    %c0_i32 = arith.constant 0 : i32
    %c0_i32_0 = arith.constant 0 : i32
    return %arg0, %c0_i32 : i32, i32
  }
  func.func @transform_1(%arg0: i32) -> (i32, i32) {
    %c0_i32 = arith.constant 0 : i32
    %c0_i32_0 = arith.constant 0 : i32
    %c0_i32_1 = arith.constant 0 : i32
    return %c0_i32, %c0_i32_0 : i32, i32
  }
  func.func @transform_2(%arg0: i32) -> (i32, i32) {
    %c0_i32 = arith.constant 0 : i32
    %c0_i32_0 = arith.constant 0 : i32
    %c0_i32_1 = arith.constant 0 : i32
    return %c0_i32, %c0_i32_0 : i32, i32
  }
  func.func @transform_3(%arg0: i32) -> (i32, i32) {
    %c0_i32 = arith.constant 0 : i32
    %c0_i32_0 = arith.constant 0 : i32
    %c0_i32_1 = arith.constant 0 : i32
    return %c0_i32, %c0_i32_0 : i32, i32
  }
  func.func @transform_4(%arg0: i32) -> (i32, i32) {
    %c0_i32 = arith.constant 0 : i32
    %c0_i32_0 = arith.constant 0 : i32
    %c0_i32_1 = arith.constant 0 : i32
    return %c0_i32, %c0_i32_0 : i32, i32
  }
  func.func @transform_5(%arg0: i32) -> (i32, i32) {
    %c0_i32 = arith.constant 0 : i32
    %c0_i32_0 = arith.constant 0 : i32
    %c0_i32_1 = arith.constant 0 : i32
    return %c0_i32, %c0_i32_0 : i32, i32
  }
  func.func @transform_6(%arg0: i32) -> (i32, i32) {
    %c0_i32 = arith.constant 0 : i32
    %c0_i32_0 = arith.constant 0 : i32
    %c0_i32_1 = arith.constant 0 : i32
    return %c0_i32, %c0_i32_0 : i32, i32
  }
  func.func @transform_7(%arg0: i32) -> (i32, i32) {
    %c0_i32 = arith.constant 0 : i32
    %c0_i32_0 = arith.constant 0 : i32
    %c0_i32_1 = arith.constant 0 : i32
    return %c0_i32, %c0_i32_0 : i32, i32
  }
  func.func @transform_8(%arg0: i32) -> (i32, i32) {
    %c0_i32 = arith.constant 0 : i32
    %c0_i32_0 = arith.constant 0 : i32
    %c0_i32_1 = arith.constant 0 : i32
    return %c0_i32, %c0_i32_0 : i32, i32
  }
  func.func @transform_9(%arg0: i32) -> (i32, i32) {
    %c0_i32 = arith.constant 0 : i32
    %c0_i32_0 = arith.constant 0 : i32
    %c0_i32_1 = arith.constant 0 : i32
    return %c0_i32, %c0_i32_0 : i32, i32
  }
  func.func @transform_10(%arg0: i32) -> (i32, i32) {
    %c0_i32 = arith.constant 0 : i32
    %c0_i32_0 = arith.constant 0 : i32
    %c0_i32_1 = arith.constant 0 : i32
    return %c0_i32, %c0_i32_0 : i32, i32
  }
  func.func @transform_11(%arg0: i32) -> (i32, i32) {
    %c0_i32 = arith.constant 0 : i32
    %c0_i32_0 = arith.constant 0 : i32
    %c0_i32_1 = arith.constant 0 : i32
    return %c0_i32, %c0_i32_0 : i32, i32
  }
  func.func @transform_12(%arg0: i32) -> (i32, i32) {
    %c0_i32 = arith.constant 0 : i32
    %c0_i32_0 = arith.constant 0 : i32
    return %arg0, %c0_i32 : i32, i32
  }
}

</mosaic_0001>

<llo_original>
// kernel: tpu_custom_call.1
$region0: #{tpu_custom_call.1}
  #allocation0 [shape = 'u32[]', space=smem, size = 0x4, offset = 0x4, fixed_abs, tag = 'smem constant byte address 0x4 - core index']
  #allocation1 [shape = 'u32[144,128]{1,0:T(1,128)}', space=vmem, size = 0x12000, scoped, tag = 'internal scratch']
  #allocation2 [shape = 'f32[144,128]{1,0:T(8,128)}', space=vmem, size = 0x12000, scoped, tag = 'scratch operand']
  #allocation3 [shape = 'f32[128,128]{1,0:T(8,128)}', space=vmem, size = 0x10000, scoped, tag = 'scratch operand']
  %s0 = inlined_call_operand.vmem [shape: f32[128,1], index: 0, kind: input, shape index: {}]
  %s1 = inlined_call_operand.vmem [shape: f32[128,8], index: 1, kind: input, shape index: {}]
  %s2 = inlined_call_operand.vmem [shape: f32[3,32], index: 2, kind: input, shape index: {}]
  %s3 = inlined_call_operand.vmem [shape: f32[1,32], index: 3, kind: input, shape index: {}]
  %s4 = inlined_call_operand.vmem [shape: f32[96,64], index: 4, kind: input, shape index: {}]
  %s5 = inlined_call_operand.vmem [shape: f32[1,64], index: 5, kind: input, shape index: {}]
  %s6 = inlined_call_operand.vmem [shape: f32[192,128], index: 6, kind: input, shape index: {}]
  %s7 = inlined_call_operand.vmem [shape: f32[1,128], index: 7, kind: input, shape index: {}]
  %s8 = inlined_call_operand.vmem [shape: f32[256,625], index: 8, kind: input, shape index: {}]
  %s9 = inlined_call_operand.vmem [shape: f32[1,625], index: 9, kind: input, shape index: {}]
  %s10 = inlined_call_operand.vmem [shape: f32[625,128], index: 10, kind: input, shape index: {}]
  %s11 = inlined_call_operand.vmem [shape: f32[1,128], index: 11, kind: input, shape index: {}]
  %s12 = inlined_call_operand.hbm [shape: f32[8,128], index: 12, kind: output, shape index: {}]
  %s13 = sld [smem:[#allocation0]]
  $region58: #{tpu_custom_call.1} parent=0
    _
  %s15 = ssub.s32 1, %s13
  %s16 = scalar_select 0, %s15, %s13
  $region1: #{tpu_custom_call.1} parent=0
    #allocation4 [shape = 'u8[4096]{0}', space=vmem, size = 0x1000, scoped, tag = 'output window, operand 0, single buffered']
    #allocation5 [shape = 's32[1]{0}', space=sflag, size = 0x4, scoped, tag = 'scoped memory for tpu_custom_call.1']
    %17 = vsyncpa [#allocation5], 0
    // Predicated region
    $region2: #{tpu_custom_call.1} parent=1 // pred_check
      _
    $region3: #{tpu_custom_call.1} parent=1 // pred_check_branch
      %19 = sbr.rel (0) target = $region5
    $region4: #{tpu_custom_call.1} parent=1 // pred_region
      _
    $region5: #{tpu_custom_call.1} parent=1 // pred_fallthru
      _
    // Predicated region
    $region6: #{tpu_custom_call.1} parent=1 // pred_check
      _
    $region7: #{tpu_custom_call.1} parent=1 // pred_check_branch
      %21 = sbr.rel (0) target = $region9
    $region8: #{tpu_custom_call.1} parent=1 // pred_region
      _
    $region9: #{tpu_custom_call.1} parent=1 // pred_fallthru
      _
    // Predicated region
    $region10: #{tpu_custom_call.1} parent=1 // pred_check
      _
    $region11: #{tpu_custom_call.1} parent=1 // pred_check_branch
      %23 = sbr.rel (0) target = $region13
    $region12: #{tpu_custom_call.1} parent=1 // pred_region
      _
    $region13: #{tpu_custom_call.1} parent=1 // pred_fallthru
      _
    // Predicated region
    $region14: #{tpu_custom_call.1} parent=1 // pred_check
      _
    $region15: #{tpu_custom_call.1} parent=1 // pred_check_branch
      %25 = sbr.rel (0) target = $region17
    $region16: #{tpu_custom_call.1} parent=1 // pred_region
      _
    $region17: #{tpu_custom_call.1} parent=1 // pred_fallthru
      _
    // Predicated region
    $region18: #{tpu_custom_call.1} parent=1 // pred_check
      _
    $region19: #{tpu_custom_call.1} parent=1 // pred_check_branch
      %27 = sbr.rel (0) target = $region21
    $region20: #{tpu_custom_call.1} parent=1 // pred_region
      _
    $region21: #{tpu_custom_call.1} parent=1 // pred_fallthru
      _
    // Predicated region
    $region22: #{tpu_custom_call.1} parent=1 // pred_check
      _
    $region23: #{tpu_custom_call.1} parent=1 // pred_check_branch
      %29 = sbr.rel (0) target = $region25
    $region24: #{tpu_custom_call.1} parent=1 // pred_region
      _
    $region25: #{tpu_custom_call.1} parent=1 // pred_fallthru
      _
    // Predicated region
    $region26: #{tpu_custom_call.1} parent=1 // pred_check
      _
    $region27: #{tpu_custom_call.1} parent=1 // pred_check_branch
      %31 = sbr.rel (0) target = $region29
    $region28: #{tpu_custom_call.1} parent=1 // pred_region
      _
    $region29: #{tpu_custom_call.1} parent=1 // pred_fallthru
      _
    // Predicated region
    $region30: #{tpu_custom_call.1} parent=1 // pred_check
      _
    $region31: #{tpu_custom_call.1} parent=1 // pred_check_branch
      %33 = sbr.rel (0) target = $region33
    $region32: #{tpu_custom_call.1} parent=1 // pred_region
      _
    $region33: #{tpu_custom_call.1} parent=1 // pred_fallthru
      _
    // Predicated region
    $region34: #{tpu_custom_call.1} parent=1 // pred_check
      _
    $region35: #{tpu_custom_call.1} parent=1 // pred_check_branch
      %35 = sbr.rel (0) target = $region37
    $region36: #{tpu_custom_call.1} parent=1 // pred_region
      _
    $region37: #{tpu_custom_call.1} parent=1 // pred_fallthru
      _
    // Predicated region
    $region38: #{tpu_custom_call.1} parent=1 // pred_check
      _
    $region39: #{tpu_custom_call.1} parent=1 // pred_check_branch
      %37 = sbr.rel (0) target = $region41
    $region40: #{tpu_custom_call.1} parent=1 // pred_region
      _
    $region41: #{tpu_custom_call.1} parent=1 // pred_fallthru
      _
    // Predicated region
    $region42: #{tpu_custom_call.1} parent=1 // pred_check
      _
    $region43: #{tpu_custom_call.1} parent=1 // pred_check_branch
      %39 = sbr.rel (0) target = $region45
    $region44: #{tpu_custom_call.1} parent=1 // pred_region
      _
    $region45: #{tpu_custom_call.1} parent=1 // pred_fallthru
      _
    // Predicated region
    $region46: #{tpu_custom_call.1} parent=1 // pred_check
      _
    $region47: #{tpu_custom_call.1} parent=1 // pred_check_branch
      %41 = sbr.rel (0) target = $region49
    $region48: #{tpu_custom_call.1} parent=1 // pred_region
      _
    $region49: #{tpu_custom_call.1} parent=1 // pred_fallthru
      _
    %v42 = vld [vmem:[%s0] sm:$0xff]
    %v43 = vld [vmem:[%s0 + $0x8] sm:$0xff]
    %v44 = vld [vmem:[%s0 + $0x10] sm:$0xff]
    %v45 = vld [vmem:[%s0 + $0x18] sm:$0xff]
    %v46 = vld [vmem:[%s0 + $0x20] sm:$0xff]
    %v47 = vld [vmem:[%s0 + $0x28] sm:$0xff]
    %v48 = vld [vmem:[%s0 + $0x30] sm:$0xff]
    %v49 = vld [vmem:[%s0 + $0x38] sm:$0xff]
    %v50 = vld [vmem:[%s0 + $0x40] sm:$0xff]
    %v51 = vld [vmem:[%s0 + $0x48] sm:$0xff]
    %v52 = vld [vmem:[%s0 + $0x50] sm:$0xff]
    %v53 = vld [vmem:[%s0 + $0x58] sm:$0xff]
    %v54 = vld [vmem:[%s0 + $0x60] sm:$0xff]
    %v55 = vld [vmem:[%s0 + $0x68] sm:$0xff]
    %v56 = vld [vmem:[%s0 + $0x70] sm:$0xff]
    %v57 = vld [vmem:[%s0 + $0x78] sm:$0xff]
    %vm58 = vcmask 7168
    %59 = vst.msk [vmem:[#allocation2 + $0x8] sm:$0xff] %vm58, %v42
    %60 = vst.msk [vmem:[#allocation2 + $0x10] sm:$0xff] %vm58, %v43
    %61 = vst.msk [vmem:[#allocation2 + $0x18] sm:$0xff] %vm58, %v44
    %62 = vst.msk [vmem:[#allocation2 + $0x20] sm:$0xff] %vm58, %v45
    %63 = vst.msk [vmem:[#allocation2 + $0x28] sm:$0xff] %vm58, %v46
    %64 = vst.msk [vmem:[#allocation2 + $0x30] sm:$0xff] %vm58, %v47
    %65 = vst.msk [vmem:[#allocation2 + $0x38] sm:$0xff] %vm58, %v48
    %66 = vst.msk [vmem:[#allocation2 + $0x40] sm:$0xff] %vm58, %v49
    %67 = vst.msk [vmem:[#allocation2 + $0x48] sm:$0xff] %vm58, %v50
    %68 = vst.msk [vmem:[#allocation2 + $0x50] sm:$0xff] %vm58, %v51
    %69 = vst.msk [vmem:[#allocation2 + $0x58] sm:$0xff] %vm58, %v52
    %70 = vst.msk [vmem:[#allocation2 + $0x60] sm:$0xff] %vm58, %v53
    %71 = vst.msk [vmem:[#allocation2 + $0x68] sm:$0xff] %vm58, %v54
    %72 = vst.msk [vmem:[#allocation2 + $0x70] sm:$0xff] %vm58, %v55
    %73 = vst.msk [vmem:[#allocation2 + $0x78] sm:$0xff] %vm58, %v56
    %74 = vst.msk [vmem:[#allocation2 + $0x80] sm:$0xff] %vm58, %v57
    %v75 = vld [vmem:[#allocation2 + $0x7] sm:$0xff]
    %v76 = vld [vmem:[#allocation2 + $0xf] sm:$0xff]
    %v77 = vld [vmem:[#allocation2 + $0x17] sm:$0xff]
    %v78 = vld [vmem:[#allocation2 + $0x1f] sm:$0xff]
    %v79 = vld [vmem:[#allocation2 + $0x27] sm:$0xff]
    %v80 = vld [vmem:[#allocation2 + $0x2f] sm:$0xff]
    %v81 = vld [vmem:[#allocation2 + $0x37] sm:$0xff]
    %v82 = vld [vmem:[#allocation2 + $0x3f] sm:$0xff]
    %v83 = vld [vmem:[#allocation2 + $0x47] sm:$0xff]
    %v84 = vld [vmem:[#allocation2 + $0x4f] sm:$0xff]
    %v85 = vld [vmem:[#allocation2 + $0x57] sm:$0xff]
    %v86 = vld [vmem:[#allocation2 + $0x5f] sm:$0xff]
    %v87 = vld [vmem:[#allocation2 + $0x67] sm:$0xff]
    %v88 = vld [vmem:[#allocation2 + $0x6f] sm:$0xff]
    %v89 = vld [vmem:[#allocation2 + $0x77] sm:$0xff]
    %v90 = vld [vmem:[#allocation2 + $0x7f] sm:$0xff]
    %v91 = vld [vmem:[#allocation2 + $0x9] sm:$0xff]
    %v92 = vld [vmem:[#allocation2 + $0x11] sm:$0xff]
    %v93 = vld [vmem:[#allocation2 + $0x19] sm:$0xff]
    %v94 = vld [vmem:[#allocation2 + $0x21] sm:$0xff]
    %v95 = vld [vmem:[#allocation2 + $0x29] sm:$0xff]
    %v96 = vld [vmem:[#allocation2 + $0x31] sm:$0xff]
    %v97 = vld [vmem:[#allocation2 + $0x39] sm:$0xff]
    %v98 = vld [vmem:[#allocation2 + $0x41] sm:$0xff]
    %v99 = vld [vmem:[#allocation2 + $0x49] sm:$0xff]
    %v100 = vld [vmem:[#allocation2 + $0x51] sm:$0xff]
    %v101 = vld [vmem:[#allocation2 + $0x59] sm:$0xff]
    %v102 = vld [vmem:[#allocation2 + $0x61] sm:$0xff]
    %v103 = vld [vmem:[#allocation2 + $0x69] sm:$0xff]
    %v104 = vld [vmem:[#allocation2 + $0x71] sm:$0xff]
    %v105 = vld [vmem:[#allocation2 + $0x79] sm:$0xff]
    %v106 = vld [vmem:[#allocation2 + $0x81] sm:$0xff]
    %v107 = vld [vmem:[%s1] sm:$0xff]
    %v108 = vld [vmem:[%s1 + $0x8] sm:$0xff]
    %v109 = vld [vmem:[%s1 + $0x10] sm:$0xff]
    %v110 = vld [vmem:[%s1 + $0x18] sm:$0xff]
    %v111 = vld [vmem:[%s1 + $0x20] sm:$0xff]
    %v112 = vld [vmem:[%s1 + $0x28] sm:$0xff]
    %v113 = vld [vmem:[%s1 + $0x30] sm:$0xff]
    %v114 = vld [vmem:[%s1 + $0x38] sm:$0xff]
    %v115 = vld [vmem:[%s1 + $0x40] sm:$0xff]
    %v116 = vld [vmem:[%s1 + $0x48] sm:$0xff]
    %v117 = vld [vmem:[%s1 + $0x50] sm:$0xff]
    %v118 = vld [vmem:[%s1 + $0x58] sm:$0xff]
    %v119 = vld [vmem:[%s1 + $0x60] sm:$0xff]
    %v120 = vld [vmem:[%s1 + $0x68] sm:$0xff]
    %v121 = vld [vmem:[%s1 + $0x70] sm:$0xff]
    %v122 = vld [vmem:[%s1 + $0x78] sm:$0xff]
    %vm123 = vcmp.gt.f32.partialorder %v107, 0.0
    %vm124 = vcmp.gt.f32.partialorder %v108, 0.0
    %vm125 = vcmp.gt.f32.partialorder %v109, 0.0
    %vm126 = vcmp.gt.f32.partialorder %v110, 0.0
    %vm127 = vcmp.gt.f32.partialorder %v111, 0.0
    %vm128 = vcmp.gt.f32.partialorder %v112, 0.0
    %vm129 = vcmp.gt.f32.partialorder %v113, 0.0
    %vm130 = vcmp.gt.f32.partialorder %v114, 0.0
    %vm131 = vcmp.gt.f32.partialorder %v115, 0.0
    %vm132 = vcmp.gt.f32.partialorder %v116, 0.0
    %vm133 = vcmp.gt.f32.partialorder %v117, 0.0
    %vm134 = vcmp.gt.f32.partialorder %v118, 0.0
    %vm135 = vcmp.gt.f32.partialorder %v119, 0.0
    %vm136 = vcmp.gt.f32.partialorder %v120, 0.0
    %vm137 = vcmp.gt.f32.partialorder %v121, 0.0
    %vm138 = vcmp.gt.f32.partialorder %v122, 0.0
    %v139 = vsel %vm123, 0.0, %v75
    %v140 = vsel %vm124, 0.0, %v76
    %v141 = vsel %vm125, 0.0, %v77
    %v142 = vsel %vm126, 0.0, %v78
    %v143 = vsel %vm127, 0.0, %v79
    %v144 = vsel %vm128, 0.0, %v80
    %v145 = vsel %vm129, 0.0, %v81
    %v146 = vsel %vm130, 0.0, %v82
    %v147 = vsel %vm131, 0.0, %v83
    %v148 = vsel %vm132, 0.0, %v84
    %v149 = vsel %vm133, 0.0, %v85
    %v150 = vsel %vm134, 0.0, %v86
    %v151 = vsel %vm135, 0.0, %v87
    %v152 = vsel %vm136, 0.0, %v88
    %v153 = vsel %vm137, 0.0, %v89
    %v154 = vsel %vm138, 0.0, %v90
    %171 = vrot.lane.b32.xlu0 %v91, 1
    %v172 = vpop.permute.xlu0 %171
    %173 = vrot.lane.b32.xlu0 %v92, 1
    %v174 = vpop.permute.xlu0 %173
    %175 = vrot.lane.b32.xlu0 %v93, 1
    %v176 = vpop.permute.xlu0 %175
    %177 = vrot.lane.b32.xlu0 %v94, 1
    %v178 = vpop.permute.xlu0 %177
    %179 = vrot.lane.b32.xlu0 %v95, 1
    %v180 = vpop.permute.xlu0 %179
    %181 = vrot.lane.b32.xlu0 %v96, 1
    %v182 = vpop.permute.xlu0 %181
    %183 = vrot.lane.b32.xlu0 %v97, 1
    %v184 = vpop.permute.xlu0 %183
    %185 = vrot.lane.b32.xlu0 %v98, 1
    %v186 = vpop.permute.xlu0 %185
    %187 = vrot.lane.b32.xlu0 %v99, 1
    %v188 = vpop.permute.xlu0 %187
    %189 = vrot.lane.b32.xlu0 %v100, 1
    %v190 = vpop.permute.xlu0 %189
    %191 = vrot.lane.b32.xlu0 %v101, 1
    %v192 = vpop.permute.xlu0 %191
    %193 = vrot.lane.b32.xlu0 %v102, 1
    %v194 = vpop.permute.xlu0 %193
    %195 = vrot.lane.b32.xlu0 %v103, 1
    %v196 = vpop.permute.xlu0 %195
    %197 = vrot.lane.b32.xlu0 %v104, 1
    %v198 = vpop.permute.xlu0 %197
    %199 = vrot.lane.b32.xlu0 %v105, 1
    %v200 = vpop.permute.xlu0 %199
    %201 = vrot.lane.b32.xlu0 %v106, 1
    %v202 = vpop.permute.xlu0 %201
    %v219 = vsel %vm123, 0.0, %v172
    %v220 = vsel %vm124, 0.0, %v174
    %v221 = vsel %vm125, 0.0, %v176
    %v222 = vsel %vm126, 0.0, %v178
    %v223 = vsel %vm127, 0.0, %v180
    %v224 = vsel %vm128, 0.0, %v182
    %v225 = vsel %vm129, 0.0, %v184
    %v226 = vsel %vm130, 0.0, %v186
    %v227 = vsel %vm131, 0.0, %v188
    %v228 = vsel %vm132, 0.0, %v190
    %v229 = vsel %vm133, 0.0, %v192
    %v230 = vsel %vm134, 0.0, %v194
    %v231 = vsel %vm135, 0.0, %v196
    %v232 = vsel %vm136, 0.0, %v198
    %v233 = vsel %vm137, 0.0, %v200
    %v234 = vsel %vm138, 0.0, %v202
    %v235 = vld [vmem:[%s2] sm:$0x7]
    %237 = vset.pattern.permute.xlu0 0
    %238 = vperm.xlu0 %237, %v139
    %v239 = vpop.permute.xlu0 %238
    %242 = vset.pattern.permute.xlu0 0
    %243 = vperm.xlu0 %242, %v140
    %v244 = vpop.permute.xlu0 %243
    %247 = vset.pattern.permute.xlu0 0
    %248 = vperm.xlu0 %247, %v141
    %v249 = vpop.permute.xlu0 %248
    %252 = vset.pattern.permute.xlu0 0
    %253 = vperm.xlu0 %252, %v142
    %v254 = vpop.permute.xlu0 %253
    %257 = vset.pattern.permute.xlu0 0
    %258 = vperm.xlu0 %257, %v143
    %v259 = vpop.permute.xlu0 %258
    %262 = vset.pattern.permute.xlu0 0
    %263 = vperm.xlu0 %262, %v144
    %v264 = vpop.permute.xlu0 %263
    %267 = vset.pattern.permute.xlu0 0
    %268 = vperm.xlu0 %267, %v145
    %v269 = vpop.permute.xlu0 %268
    %272 = vset.pattern.permute.xlu0 0
    %273 = vperm.xlu0 %272, %v146
    %v274 = vpop.permute.xlu0 %273
    %277 = vset.pattern.permute.xlu0 0
    %278 = vperm.xlu0 %277, %v147
    %v279 = vpop.permute.xlu0 %278
    %282 = vset.pattern.permute.xlu0 0
    %283 = vperm.xlu0 %282, %v148
    %v284 = vpop.permute.xlu0 %283
    %287 = vset.pattern.permute.xlu0 0
    %288 = vperm.xlu0 %287, %v149
    %v289 = vpop.permute.xlu0 %288
    %292 = vset.pattern.permute.xlu0 0
    %293 = vperm.xlu0 %292, %v150
    %v294 = vpop.permute.xlu0 %293
    %297 = vset.pattern.permute.xlu0 0
    %298 = vperm.xlu0 %297, %v151
    %v299 = vpop.permute.xlu0 %298
    %302 = vset.pattern.permute.xlu0 0
    %303 = vperm.xlu0 %302, %v152
    %v304 = vpop.permute.xlu0 %303
    %307 = vset.pattern.permute.xlu0 0
    %308 = vperm.xlu0 %307, %v153
    %v309 = vpop.permute.xlu0 %308
    %312 = vset.pattern.permute.xlu0 0
    %313 = vperm.xlu0 %312, %v154
    %v314 = vpop.permute.xlu0 %313
    %v316 = vlaneseq
    %v317 = vshrl.u32 %v316, 7
    %v318 = vsub.s32 0, %v317
    %v319 = vrot.slane %v235, %v318
    %v320 = vmul.f32 %v239, %v319
    %v321 = vmul.f32 %v244, %v319
    %v322 = vmul.f32 %v249, %v319
    %v323 = vmul.f32 %v254, %v319
    %v324 = vmul.f32 %v259, %v319
    %v325 = vmul.f32 %v264, %v319
    %v326 = vmul.f32 %v269, %v319
    %v327 = vmul.f32 %v274, %v319
    %v328 = vmul.f32 %v279, %v319
    %v329 = vmul.f32 %v284, %v319
    %v330 = vmul.f32 %v289, %v319
    %v331 = vmul.f32 %v294, %v319
    %v332 = vmul.f32 %v299, %v319
    %v333 = vmul.f32 %v304, %v319
    %v334 = vmul.f32 %v309, %v319
    %v335 = vmul.f32 %v314, %v319
    %337 = vset.pattern.permute.xlu0 0
    %338 = vperm.xlu0 %337, %v42
    %v339 = vpop.permute.xlu0 %338
    %342 = vset.pattern.permute.xlu0 0
    %343 = vperm.xlu0 %342, %v43
    %v344 = vpop.permute.xlu0 %343
    %347 = vset.pattern.permute.xlu0 0
    %348 = vperm.xlu0 %347, %v44
    %v349 = vpop.permute.xlu0 %348
    %352 = vset.pattern.permute.xlu0 0
    %353 = vperm.xlu0 %352, %v45
    %v354 = vpop.permute.xlu0 %353
    %357 = vset.pattern.permute.xlu0 0
    %358 = vperm.xlu0 %357, %v46
    %v359 = vpop.permute.xlu0 %358
    %362 = vset.pattern.permute.xlu0 0
    %363 = vperm.xlu0 %362, %v47
    %v364 = vpop.permute.xlu0 %363
    %367 = vset.pattern.permute.xlu0 0
    %368 = vperm.xlu0 %367, %v48
    %v369 = vpop.permute.xlu0 %368
    %372 = vset.pattern.permute.xlu0 0
    %373 = vperm.xlu0 %372, %v49
    %v374 = vpop.permute.xlu0 %373
    %377 = vset.pattern.permute.xlu0 0
    %378 = vperm.xlu0 %377, %v50
    %v379 = vpop.permute.xlu0 %378
    %382 = vset.pattern.permute.xlu0 0
    %383 = vperm.xlu0 %382, %v51
    %v384 = vpop.permute.xlu0 %383
    %387 = vset.pattern.permute.xlu0 0
    %388 = vperm.xlu0 %387, %v52
    %v389 = vpop.permute.xlu0 %388
    %392 = vset.pattern.permute.xlu0 0
    %393 = vperm.xlu0 %392, %v53
    %v394 = vpop.permute.xlu0 %393
    %397 = vset.pattern.permute.xlu0 0
    %398 = vperm.xlu0 %397, %v54
    %v399 = vpop.permute.xlu0 %398
    %402 = vset.pattern.permute.xlu0 0
    %403 = vperm.xlu0 %402, %v55
    %v404 = vpop.permute.xlu0 %403
    %407 = vset.pattern.permute.xlu0 0
    %408 = vperm.xlu0 %407, %v56
    %v409 = vpop.permute.xlu0 %408
    %412 = vset.pattern.permute.xlu0 0
    %413 = vperm.xlu0 %412, %v57
    %v414 = vpop.permute.xlu0 %413
    %v416 = vlaneseq
    %v417 = vshrl.u32 %v416, 7
    %v418 = vsub.s32 1, %v417
    %v419 = vrot.slane %v235, %v418
    %v420 = vmul.f32 %v339, %v419
    %v421 = vmul.f32 %v344, %v419
    %v422 = vmul.f32 %v349, %v419
    %v423 = vmul.f32 %v354, %v419
    %v424 = vmul.f32 %v359, %v419
    %v425 = vmul.f32 %v364, %v419
    %v426 = vmul.f32 %v369, %v419
    %v427 = vmul.f32 %v374, %v419
    %v428 = vmul.f32 %v379, %v419
    %v429 = vmul.f32 %v384, %v419
    %v430 = vmul.f32 %v389, %v419
    %v431 = vmul.f32 %v394, %v419
    %v432 = vmul.f32 %v399, %v419
    %v433 = vmul.f32 %v404, %v419
    %v434 = vmul.f32 %v409, %v419
    %v435 = vmul.f32 %v414, %v419
    %v436 = vadd.f32 %v320, %v420
    %v437 = vadd.f32 %v321, %v421
    %v438 = vadd.f32 %v322, %v422
    %v439 = vadd.f32 %v323, %v423
    %v440 = vadd.f32 %v324, %v424
    %v441 = vadd.f32 %v325, %v425
    %v442 = vadd.f32 %v326, %v426
    %v443 = vadd.f32 %v327, %v427
    %v444 = vadd.f32 %v328, %v428
    %v445 = vadd.f32 %v329, %v429
    %v446 = vadd.f32 %v330, %v430
    %v447 = vadd.f32 %v331, %v431
    %v448 = vadd.f32 %v332, %v432
    %v449 = vadd.f32 %v333, %v433
    %v450 = vadd.f32 %v334, %v434
    %v451 = vadd.f32 %v335, %v435
    %453 = vset.pattern.permute.xlu0 1
    %454 = vperm.xlu0 %453, %v219
    %v455 = vpop.permute.xlu0 %454
    %458 = vset.pattern.permute.xlu0 1
    %459 = vperm.xlu0 %458, %v220
    %v460 = vpop.permute.xlu0 %459
    %463 = vset.pattern.permute.xlu0 1
    %464 = vperm.xlu0 %463, %v221
    %v465 = vpop.permute.xlu0 %464
    %468 = vset.pattern.permute.xlu0 1
    %469 = vperm.xlu0 %468, %v222
    %v470 = vpop.permute.xlu0 %469
    %473 = vset.pattern.permute.xlu0 1
    %474 = vperm.xlu0 %473, %v223
    %v475 = vpop.permute.xlu0 %474
    %478 = vset.pattern.permute.xlu0 1
    %479 = vperm.xlu0 %478, %v224
    %v480 = vpop.permute.xlu0 %479
    %483 = vset.pattern.permute.xlu0 1
    %484 = vperm.xlu0 %483, %v225
    %v485 = vpop.permute.xlu0 %484
    %488 = vset.pattern.permute.xlu0 1
    %489 = vperm.xlu0 %488, %v226
    %v490 = vpop.permute.xlu0 %489
    %493 = vset.pattern.permute.xlu0 1
    %494 = vperm.xlu0 %493, %v227
    %v495 = vpop.permute.xlu0 %494
    %498 = vset.pattern.permute.xlu0 1
    %499 = vperm.xlu0 %498, %v228
    %v500 = vpop.permute.xlu0 %499
    %503 = vset.pattern.permute.xlu0 1
    %504 = vperm.xlu0 %503, %v229
    %v505 = vpop.permute.xlu0 %504
    %508 = vset.pattern.permute.xlu0 1
    %509 = vperm.xlu0 %508, %v230
    %v510 = vpop.permute.xlu0 %509
    %513 = vset.pattern.permute.xlu0 1
    %514 = vperm.xlu0 %513, %v231
    %v515 = vpop.permute.xlu0 %514
    %518 = vset.pattern.permute.xlu0 1
    %519 = vperm.xlu0 %518, %v232
    %v520 = vpop.permute.xlu0 %519
    %523 = vset.pattern.permute.xlu0 1
    %524 = vperm.xlu0 %523, %v233
    %v525 = vpop.permute.xlu0 %524
    %528 = vset.pattern.permute.xlu0 1
    %529 = vperm.xlu0 %528, %v234
    %v530 = vpop.permute.xlu0 %529
    %v532 = vlaneseq
    %v533 = vshrl.u32 %v532, 7
    %v534 = vsub.s32 2, %v533
    %v535 = vrot.slane %v235, %v534
    %v536 = vmul.f32 %v455, %v535
    %v537 = vmul.f32 %v460, %v535
    %v538 = vmul.f32 %v465, %v535
    %v539 = vmul.f32 %v470, %v535
    %v540 = vmul.f32 %v475, %v535
    %v541 = vmul.f32 %v480, %v535
    %v542 = vmul.f32 %v485, %v535
    %v543 = vmul.f32 %v490, %v535
    %v544 = vmul.f32 %v495, %v535
    %v545 = vmul.f32 %v500, %v535
    %v546 = vmul.f32 %v505, %v535
    %v547 = vmul.f32 %v510, %v535
    %v548 = vmul.f32 %v515, %v535
    %v549 = vmul.f32 %v520, %v535
    %v550 = vmul.f32 %v525, %v535
    %v551 = vmul.f32 %v530, %v535
    %v552 = vadd.f32 %v436, %v536
    %v553 = vadd.f32 %v437, %v537
    %v554 = vadd.f32 %v438, %v538
    %v555 = vadd.f32 %v439, %v539
    %v556 = vadd.f32 %v440, %v540
    %v557 = vadd.f32 %v441, %v541
    %v558 = vadd.f32 %v442, %v542
    %v559 = vadd.f32 %v443, %v543
    %v560 = vadd.f32 %v444, %v544
    %v561 = vadd.f32 %v445, %v545
    %v562 = vadd.f32 %v446, %v546
    %v563 = vadd.f32 %v447, %v547
    %v564 = vadd.f32 %v448, %v548
    %v565 = vadd.f32 %v449, %v549
    %v566 = vadd.f32 %v450, %v550
    %v567 = vadd.f32 %v451, %v551
    %v568 = vld [vmem:[%s3] sm:$0x1]
    %v570 = vlaneseq
    %v571 = vshrl.u32 %v570, 7
    %v572 = vsub.s32 0, %v571
    %v573 = vrot.slane %v568, %v572
    %v575 = vadd.f32 %v552, %v573
    %v576 = vadd.f32 %v553, %v573
    %v577 = vadd.f32 %v554, %v573
    %v578 = vadd.f32 %v555, %v573
    %v579 = vadd.f32 %v556, %v573
    %v580 = vadd.f32 %v557, %v573
    %v581 = vadd.f32 %v558, %v573
    %v582 = vadd.f32 %v559, %v573
    %v583 = vadd.f32 %v560, %v573
    %v584 = vadd.f32 %v561, %v573
    %v585 = vadd.f32 %v562, %v573
    %v586 = vadd.f32 %v563, %v573
    %v587 = vadd.f32 %v564, %v573
    %v588 = vadd.f32 %v565, %v573
    %v589 = vadd.f32 %v566, %v573
    %v590 = vadd.f32 %v567, %v573
    %v591 = vmax.f32 %v575, 0.0
    %v592 = vmax.f32 %v576, 0.0
    %v593 = vmax.f32 %v577, 0.0
    %v594 = vmax.f32 %v578, 0.0
    %v595 = vmax.f32 %v579, 0.0
    %v596 = vmax.f32 %v580, 0.0
    %v597 = vmax.f32 %v581, 0.0
    %v598 = vmax.f32 %v582, 0.0
    %v599 = vmax.f32 %v583, 0.0
    %v600 = vmax.f32 %v584, 0.0
    %v601 = vmax.f32 %v585, 0.0
    %v602 = vmax.f32 %v586, 0.0
    %v603 = vmax.f32 %v587, 0.0
    %v604 = vmax.f32 %v588, 0.0
    %v605 = vmax.f32 %v589, 0.0
    %v606 = vmax.f32 %v590, 0.0
    %vm607 = vcmask 261120
    %608 = vst.msk [vmem:[#allocation3] sm:$0xff] %vm607, %v591
    %609 = vst.msk [vmem:[#allocation3 + $0x8] sm:$0xff] %vm607, %v592
    %610 = vst.msk [vmem:[#allocation3 + $0x10] sm:$0xff] %vm607, %v593
    %611 = vst.msk [vmem:[#allocation3 + $0x18] sm:$0xff] %vm607, %v594
    %612 = vst.msk [vmem:[#allocation3 + $0x20] sm:$0xff] %vm607, %v595
    %613 = vst.msk [vmem:[#allocation3 + $0x28] sm:$0xff] %vm607, %v596
    %614 = vst.msk [vmem:[#allocation3 + $0x30] sm:$0xff] %vm607, %v597
    %615 = vst.msk [vmem:[#allocation3 + $0x38] sm:$0xff] %vm607, %v598
    %616 = vst.msk [vmem:[#allocation3 + $0x40] sm:$0xff] %vm607, %v599
    %617 = vst.msk [vmem:[#allocation3 + $0x48] sm:$0xff] %vm607, %v600
    %618 = vst.msk [vmem:[#allocation3 + $0x50] sm:$0xff] %vm607, %v601
    %619 = vst.msk [vmem:[#allocation3 + $0x58] sm:$0xff] %vm607, %v602
    %620 = vst.msk [vmem:[#allocation3 + $0x60] sm:$0xff] %vm607, %v603
    %621 = vst.msk [vmem:[#allocation3 + $0x68] sm:$0xff] %vm607, %v604
    %622 = vst.msk [vmem:[#allocation3 + $0x70] sm:$0xff] %vm607, %v605
    %623 = vst.msk [vmem:[#allocation3 + $0x78] sm:$0xff] %vm607, %v606
    %v624 = vld [vmem:[#allocation3] ss:$2 sm:$0xff]
    %s625 = scalar_lea.vmem [#allocation3], 16
    %v626 = vld [vmem:[%s625] ss:$2 sm:$0xff]
    %s627 = scalar_lea.vmem [#allocation3], 32
    %v628 = vld [vmem:[%s627] ss:$2 sm:$0xff]
    %s629 = scalar_lea.vmem [#allocation3], 48
    %v630 = vld [vmem:[%s629] ss:$2 sm:$0xff]
    %s631 = scalar_lea.vmem [#allocation3], 64
    %v632 = vld [vmem:[%s631] ss:$2 sm:$0xff]
    %s633 = scalar_lea.vmem [#allocation3], 80
    %v634 = vld [vmem:[%s633] ss:$2 sm:$0xff]
    %s635 = scalar_lea.vmem [#allocation3], 96
    %v636 = vld [vmem:[%s635] ss:$2 sm:$0xff]
    %s637 = scalar_lea.vmem [#allocation3], 112
    %v638 = vld [vmem:[%s637] ss:$2 sm:$0xff]
    %s639 = scalar_lea.vmem [#allocation3], 1
    %v640 = vld [vmem:[%s639] ss:$2 sm:$0xff]
    %s641 = scalar_lea.vmem [#allocation3], 17
    %v642 = vld [vmem:[%s641] ss:$2 sm:$0xff]
    %s643 = scalar_lea.vmem [#allocation3], 33
    %v644 = vld [vmem:[%s643] ss:$2 sm:$0xff]
    %s645 = scalar_lea.vmem [#allocation3], 49
    %v646 = vld [vmem:[%s645] ss:$2 sm:$0xff]
    %s647 = scalar_lea.vmem [#allocation3], 65
    %v648 = vld [vmem:[%s647] ss:$2 sm:$0xff]
    %s649 = scalar_lea.vmem [#allocation3], 81
    %v650 = vld [vmem:[%s649] ss:$2 sm:$0xff]
    %s651 = scalar_lea.vmem [#allocation3], 97
    %v652 = vld [vmem:[%s651] ss:$2 sm:$0xff]
    %s653 = scalar_lea.vmem [#allocation3], 113
    %v654 = vld [vmem:[%s653] ss:$2 sm:$0xff]
    %v655 = vmax.f32 %v624, %v640
    %v656 = vmax.f32 %v626, %v642
    %v657 = vmax.f32 %v628, %v644
    %v658 = vmax.f32 %v630, %v646
    %v659 = vmax.f32 %v632, %v648
    %v660 = vmax.f32 %v634, %v650
    %v661 = vmax.f32 %v636, %v652
    %v662 = vmax.f32 %v638, %v654
    %663 = vst.msk [vmem:[#allocation2 + $0x8] sm:$0xff] %vm607, %v655
    %664 = vst.msk [vmem:[#allocation2 + $0x10] sm:$0xff] %vm607, %v656
    %665 = vst.msk [vmem:[#allocation2 + $0x18] sm:$0xff] %vm607, %v657
    %666 = vst.msk [vmem:[#allocation2 + $0x20] sm:$0xff] %vm607, %v658
    %667 = vst.msk [vmem:[#allocation2 + $0x28] sm:$0xff] %vm607, %v659
    %668 = vst.msk [vmem:[#allocation2 + $0x30] sm:$0xff] %vm607, %v660
    %669 = vst.msk [vmem:[#allocation2 + $0x38] sm:$0xff] %vm607, %v661
    %670 = vst.msk [vmem:[#allocation2 + $0x40] sm:$0xff] %vm607, %v662
    %v671 = vld [vmem:[#allocation2 + $0x7] sm:$0xff]
    %v672 = vld [vmem:[#allocation2 + $0xf] sm:$0xff]
    %v673 = vld [vmem:[#allocation2 + $0x17] sm:$0xff]
    %v674 = vld [vmem:[#allocation2 + $0x1f] sm:$0xff]
    %v675 = vld [vmem:[#allocation2 + $0x27] sm:$0xff]
    %v676 = vld [vmem:[#allocation2 + $0x2f] sm:$0xff]
    %v677 = vld [vmem:[#allocation2 + $0x37] sm:$0xff]
    %v678 = vld [vmem:[#allocation2 + $0x3f] sm:$0xff]
    %v679 = vld [vmem:[#allocation2 + $0x9] sm:$0xff]
    %v680 = vld [vmem:[#allocation2 + $0x11] sm:$0xff]
    %v681 = vld [vmem:[#allocation2 + $0x19] sm:$0xff]
    %v682 = vld [vmem:[#allocation2 + $0x21] sm:$0xff]
    %v683 = vld [vmem:[#allocation2 + $0x29] sm:$0xff]
    %v684 = vld [vmem:[#allocation2 + $0x31] sm:$0xff]
    %v685 = vld [vmem:[#allocation2 + $0x39] sm:$0xff]
    %v686 = vld [vmem:[#allocation2 + $0x41] sm:$0xff]
    %v687 = vld [vmem:[%s1] sm:$0xff]
    %v688 = vld [vmem:[%s1 + $0x8] sm:$0xff]
    %v689 = vld [vmem:[%s1 + $0x10] sm:$0xff]
    %v690 = vld [vmem:[%s1 + $0x18] sm:$0xff]
    %v691 = vld [vmem:[%s1 + $0x20] sm:$0xff]
    %v692 = vld [vmem:[%s1 + $0x28] sm:$0xff]
    %v693 = vld [vmem:[%s1 + $0x30] sm:$0xff]
    %v694 = vld [vmem:[%s1 + $0x38] sm:$0xff]
    %vm695 = vcmp.gt.f32.partialorder %v687, 0.0
    %vm696 = vcmp.gt.f32.partialorder %v688, 0.0
    %vm697 = vcmp.gt.f32.partialorder %v689, 0.0
    %vm698 = vcmp.gt.f32.partialorder %v690, 0.0
    %vm699 = vcmp.gt.f32.partialorder %v691, 0.0
    %vm700 = vcmp.gt.f32.partialorder %v692, 0.0
    %vm701 = vcmp.gt.f32.partialorder %v693, 0.0
    %vm702 = vcmp.gt.f32.partialorder %v694, 0.0
    %v703 = vsel %vm695, 1, 0
    %v704 = vsel %vm696, 1, 0
    %v705 = vsel %vm697, 1, 0
    %v706 = vsel %vm698, 1, 0
    %v707 = vsel %vm699, 1, 0
    %v708 = vsel %vm700, 1, 0
    %v709 = vsel %vm701, 1, 0
    %v710 = vsel %vm702, 1, 0
    %711 = vset.pattern.permute.xlu0 2
    %712 = vperm.xlu0 %711, %v703
    %v713 = vpop.permute.xlu0 %712
    %714 = vset.pattern.permute.xlu0 2
    %715 = vperm.xlu0 %714, %v704
    %v716 = vpop.permute.xlu0 %715
    %717 = vset.pattern.permute.xlu0 2
    %718 = vperm.xlu0 %717, %v705
    %v719 = vpop.permute.xlu0 %718
    %720 = vset.pattern.permute.xlu0 2
    %721 = vperm.xlu0 %720, %v706
    %v722 = vpop.permute.xlu0 %721
    %723 = vset.pattern.permute.xlu0 2
    %724 = vperm.xlu0 %723, %v707
    %v725 = vpop.permute.xlu0 %724
    %726 = vset.pattern.permute.xlu0 2
    %727 = vperm.xlu0 %726, %v708
    %v728 = vpop.permute.xlu0 %727
    %729 = vset.pattern.permute.xlu0 2
    %730 = vperm.xlu0 %729, %v709
    %v731 = vpop.permute.xlu0 %730
    %732 = vset.pattern.permute.xlu0 2
    %733 = vperm.xlu0 %732, %v710
    %v734 = vpop.permute.xlu0 %733
    %vm735 = vcmp.eq.s32.totalorder %v713, 1
    %vm736 = vcmp.eq.s32.totalorder %v716, 1
    %vm737 = vcmp.eq.s32.totalorder %v719, 1
    %vm738 = vcmp.eq.s32.totalorder %v722, 1
    %vm739 = vcmp.eq.s32.totalorder %v725, 1
    %vm740 = vcmp.eq.s32.totalorder %v728, 1
    %vm741 = vcmp.eq.s32.totalorder %v731, 1
    %vm742 = vcmp.eq.s32.totalorder %v734, 1
    %v743 = vsel %vm735, 0.0, %v671
    %v744 = vsel %vm736, 0.0, %v672
    %v745 = vsel %vm737, 0.0, %v673
    %v746 = vsel %vm738, 0.0, %v674
    %v747 = vsel %vm739, 0.0, %v675
    %v748 = vsel %vm740, 0.0, %v676
    %v749 = vsel %vm741, 0.0, %v677
    %v750 = vsel %vm742, 0.0, %v678
    %751 = vset.pattern.permute.xlu0 3
    %752 = vperm.xlu0 %751, %v703
    %v753 = vpop.permute.xlu0 %752
    %754 = vset.pattern.permute.xlu0 3
    %755 = vperm.xlu0 %754, %v704
    %v756 = vpop.permute.xlu0 %755
    %757 = vset.pattern.permute.xlu0 3
    %758 = vperm.xlu0 %757, %v705
    %v759 = vpop.permute.xlu0 %758
    %760 = vset.pattern.permute.xlu0 3
    %761 = vperm.xlu0 %760, %v706
    %v762 = vpop.permute.xlu0 %761
    %763 = vset.pattern.permute.xlu0 3
    %764 = vperm.xlu0 %763, %v707
    %v765 = vpop.permute.xlu0 %764
    %766 = vset.pattern.permute.xlu0 3
    %767 = vperm.xlu0 %766, %v708
    %v768 = vpop.permute.xlu0 %767
    %769 = vset.pattern.permute.xlu0 3
    %770 = vperm.xlu0 %769, %v709
    %v771 = vpop.permute.xlu0 %770
    %772 = vset.pattern.permute.xlu0 3
    %773 = vperm.xlu0 %772, %v710
    %v774 = vpop.permute.xlu0 %773
    %vm775 = vcmp.eq.s32.totalorder %v753, 1
    %vm776 = vcmp.eq.s32.totalorder %v756, 1
    %vm777 = vcmp.eq.s32.totalorder %v759, 1
    %vm778 = vcmp.eq.s32.totalorder %v762, 1
    %vm779 = vcmp.eq.s32.totalorder %v765, 1
    %vm780 = vcmp.eq.s32.totalorder %v768, 1
    %vm781 = vcmp.eq.s32.totalorder %v771, 1
    %vm782 = vcmp.eq.s32.totalorder %v774, 1
    %v783 = vsel %vm775, 0.0, %v679
    %v784 = vsel %vm776, 0.0, %v680
    %v785 = vsel %vm777, 0.0, %v681
    %v786 = vsel %vm778, 0.0, %v682
    %v787 = vsel %vm779, 0.0, %v683
    %v788 = vsel %vm780, 0.0, %v684
    %v789 = vsel %vm781, 0.0, %v685
    %v790 = vsel %vm782, 0.0, %v686
    %v791 = vld [vmem:[%s4] sm:$0xff]
    %v792 = vld [vmem:[%s4 + $0x8] sm:$0xff]
    %v793 = vld [vmem:[%s4 + $0x10] sm:$0xff]
    %v794 = vld [vmem:[%s4 + $0x18] sm:$0xff]
    %v795 = vld [vmem:[%s4 + $0x20] sm:$0xff]
    %v796 = vld [vmem:[%s4 + $0x28] sm:$0xff]
    %v797 = vld [vmem:[%s4 + $0x30] sm:$0xff]
    %v798 = vld [vmem:[%s4 + $0x38] sm:$0xff]
    %v800 = vsel %vm607, %v655, 0
    %v803 = vsel %vm607, %v656, 0
    %v806 = vsel %vm607, %v657, 0
    %v809 = vsel %vm607, %v658, 0
    %v812 = vsel %vm607, %v659, 0
    %v815 = vsel %vm607, %v660, 0
    %v818 = vsel %vm607, %v661, 0
    %v821 = vsel %vm607, %v662, 0
    %823 = vmatprep.subr.mxu0 0.0
    %824 = vmatpush1.msra.mxu0 %v795
    %825 = vmatprep.subr.mxu0 0.0
    %826 = vmatpush1.msra.mxu0 %v796
    %827 = vmatprep.subr.mxu0 0.0
    %828 = vmatpush1.msra.mxu0 %v797
    %829 = vmatprep.subr.mxu0 0.0
    %830 = vmatpush1.msra.mxu0 %v798
    %831 = vmatprep.subr.mxu0 0.0
    %832 = vmatpush1.msra.mxu0 0.0
    %833 = vmatprep.subr.mxu0 0.0
    %834 = vmatpush1.msra.mxu0 0.0
    %835 = vmatprep.subr.mxu0 0.0
    %836 = vmatpush1.msra.mxu0 0.0
    %837 = vmatprep.subr.mxu0 0.0
    %838 = vmatpush1.msra.mxu0 0.0
    %839 = vmatprep.subr.mxu0 0.0
    %840 = vmatpush1.msra.mxu0 0.0
    %841 = vmatprep.subr.mxu0 0.0
    %842 = vmatpush1.msra.mxu0 0.0
    %843 = vmatprep.subr.mxu0 0.0
    %844 = vmatpush1.msra.mxu0 0.0
    %845 = vmatprep.subr.mxu0 0.0
    %846 = vmatpush1.msra.mxu0 0.0
    %847 = vmatprep.subr.mxu0 0.0
    %848 = vmatpush1.msra.mxu0 0.0
    %849 = vmatprep.subr.mxu0 0.0
    %850 = vmatpush1.msra.mxu0 0.0
    %851 = vmatprep.subr.mxu0 0.0
    %852 = vmatpush1.msra.mxu0 0.0
    %853 = vmatprep.subr.mxu0 0.0
    %854 = vmatpush1.msra.mxu0 0.0
    %855 = vmatprep.subr.mxu0 0.0
    %856 = vmatpush1.msra.mxu0 0.0
    %857 = vmatprep.subr.mxu0 0.0
    %858 = vmatpush1.msra.mxu0 0.0
    %859 = vmatprep.subr.mxu0 0.0
    %860 = vmatpush1.msra.mxu0 0.0
    %861 = vmatprep.subr.mxu0 0.0
    %862 = vmatpush1.msra.mxu0 0.0
    %863 = vmatprep.subr.mxu0 0.0
    %864 = vmatpush1.msra.mxu0 0.0
    %865 = vmatprep.subr.mxu0 0.0
    %866 = vmatpush1.msra.mxu0 0.0
    %867 = vmatprep.subr.mxu0 0.0
    %868 = vmatpush1.msra.mxu0 0.0
    %869 = vmatprep.subr.mxu0 0.0
    %870 = vmatpush1.msra.mxu0 0.0
    %871 = vmatprep.subr.mxu0 0.0
    %872 = vmatpush1.msra.mxu0 0.0
    %873 = vmatprep.subr.mxu0 0.0
    %874 = vmatpush1.msra.mxu0 0.0
    %875 = vmatprep.subr.mxu0 0.0
    %876 = vmatpush1.msra.mxu0 0.0
    %877 = vmatprep.subr.mxu0 0.0
    %878 = vmatpush1.msra.mxu0 0.0
    %879 = vmatprep.subr.mxu0 0.0
    %880 = vmatpush1.msra.mxu0 0.0
    %881 = vmatprep.subr.mxu0 0.0
    %882 = vmatpush1.msra.mxu0 0.0
    %883 = vmatprep.subr.mxu0 0.0
    %884 = vmatpush1.msra.mxu0 0.0
    %885 = vmatprep.subr.mxu0 0.0
    %886 = vmatpush1.msra.mxu0 0.0
    %887 = vmatprep.mubr.f32.mxu0 0.0
    %888 = vmatmul.mubr.f32.gmra.mrb[0].mxu0 %v800
    %v889 = vpop.f32.mrb[0].mxu0
    %v890 = vadd.f32 0.0, %v889
    %v891 = vpop.f32.mrb[0].mxu0
    %892 = vmatprep.mubr.f32.mxu0 0.0
    %893 = vmatmul.mubr.f32.gmra.mrb[0].mxu0 %v803
    %v894 = vpop.f32.mrb[0].mxu0
    %v895 = vadd.f32 0.0, %v894
    %v896 = vpop.f32.mrb[0].mxu0
    %897 = vmatprep.mubr.f32.mxu0 0.0
    %898 = vmatmul.mubr.f32.gmra.mrb[0].mxu0 %v806
    %v899 = vpop.f32.mrb[0].mxu0
    %v900 = vadd.f32 0.0, %v899
    %v901 = vpop.f32.mrb[0].mxu0
    %902 = vmatprep.mubr.f32.mxu0 0.0
    %903 = vmatmul.mubr.f32.gmra.mrb[0].mxu0 %v809
    %v904 = vpop.f32.mrb[0].mxu0
    %v905 = vadd.f32 0.0, %v904
    %v906 = vpop.f32.mrb[0].mxu0
    %907 = vmatprep.mubr.f32.mxu0 0.0
    %908 = vmatmul.mubr.f32.gmra.mrb[0].mxu0 %v812
    %v909 = vpop.f32.mrb[0].mxu0
    %v910 = vadd.f32 0.0, %v909
    %v911 = vpop.f32.mrb[0].mxu0
    %912 = vmatprep.mubr.f32.mxu0 0.0
    %913 = vmatmul.mubr.f32.gmra.mrb[0].mxu0 %v815
    %v914 = vpop.f32.mrb[0].mxu0
    %v915 = vadd.f32 0.0, %v914
    %v916 = vpop.f32.mrb[0].mxu0
    %917 = vmatprep.mubr.f32.mxu0 0.0
    %918 = vmatmul.mubr.f32.gmra.mrb[0].mxu0 %v818
    %v919 = vpop.f32.mrb[0].mxu0
    %v920 = vadd.f32 0.0, %v919
    %v921 = vpop.f32.mrb[0].mxu0
    %922 = vmatprep.mubr.f32.mxu0 0.0
    %923 = vmatmul.mubr.f32.gmra.mrb[0].mxu0 %v821
    %v924 = vpop.f32.mrb[0].mxu0
    %v925 = vadd.f32 0.0, %v924
    %v926 = vpop.f32.mrb[0].mxu0
    %927 = vdwg.mxu0
    %v929 = vsel %vm607, %v743, 0
    %v932 = vsel %vm607, %v744, 0
    %v935 = vsel %vm607, %v745, 0
    %v938 = vsel %vm607, %v746, 0
    %v941 = vsel %vm607, %v747, 0
    %v944 = vsel %vm607, %v748, 0
    %v947 = vsel %vm607, %v749, 0
    %v950 = vsel %vm607, %v750, 0
    %952 = vmatprep.subr.mxu0 0.0
    %953 = vmatpush1.msra.mxu0 %v791
    %954 = vmatprep.subr.mxu0 0.0
    %955 = vmatpush1.msra.mxu0 %v792
    %956 = vmatprep.subr.mxu0 0.0
    %957 = vmatpush1.msra.mxu0 %v793
    %958 = vmatprep.subr.mxu0 0.0
    %959 = vmatpush1.msra.mxu0 %v794
    %960 = vmatprep.subr.mxu0 0.0
    %961 = vmatpush1.msra.mxu0 0.0
    %962 = vmatprep.subr.mxu0 0.0
    %963 = vmatpush1.msra.mxu0 0.0
    %964 = vmatprep.subr.mxu0 0.0
    %965 = vmatpush1.msra.mxu0 0.0
    %966 = vmatprep.subr.mxu0 0.0
    %967 = vmatpush1.msra.mxu0 0.0
    %968 = vmatprep.subr.mxu0 0.0
    %969 = vmatpush1.msra.mxu0 0.0
    %970 = vmatprep.subr.mxu0 0.0
    %971 = vmatpush1.msra.mxu0 0.0
    %972 = vmatprep.subr.mxu0 0.0
    %973 = vmatpush1.msra.mxu0 0.0
    %974 = vmatprep.subr.mxu0 0.0
    %975 = vmatpush1.msra.mxu0 0.0
    %976 = vmatprep.subr.mxu0 0.0
    %977 = vmatpush1.msra.mxu0 0.0
    %978 = vmatprep.subr.mxu0 0.0
    %979 = vmatpush1.msra.mxu0 0.0
    %980 = vmatprep.subr.mxu0 0.0
    %981 = vmatpush1.msra.mxu0 0.0
    %982 = vmatprep.subr.mxu0 0.0
    %983 = vmatpush1.msra.mxu0 0.0
    %984 = vmatprep.subr.mxu0 0.0
    %985 = vmatpush1.msra.mxu0 0.0
    %986 = vmatprep.subr.mxu0 0.0
    %987 = vmatpush1.msra.mxu0 0.0
    %988 = vmatprep.subr.mxu0 0.0
    %989 = vmatpush1.msra.mxu0 0.0
    %990 = vmatprep.subr.mxu0 0.0
    %991 = vmatpush1.msra.mxu0 0.0
    %992 = vmatprep.subr.mxu0 0.0
    %993 = vmatpush1.msra.mxu0 0.0
    %994 = vmatprep.subr.mxu0 0.0
    %995 = vmatpush1.msra.mxu0 0.0
    %996 = vmatprep.subr.mxu0 0.0
    %997 = vmatpush1.msra.mxu0 0.0
    %998 = vmatprep.subr.mxu0 0.0
    %999 = vmatpush1.msra.mxu0 0.0
    %1000 = vmatprep.subr.mxu0 0.0
    %1001 = vmatpush1.msra.mxu0 0.0
    %1002 = vmatprep.subr.mxu0 0.0
    %1003 = vmatpush1.msra.mxu0 0.0
    %1004 = vmatprep.subr.mxu0 0.0
    %1005 = vmatpush1.msra.mxu0 0.0
    %1006 = vmatprep.subr.mxu0 0.0
    %1007 = vmatpush1.msra.mxu0 0.0
    %1008 = vmatprep.subr.mxu0 0.0
    %1009 = vmatpush1.msra.mxu0 0.0
    %1010 = vmatprep.subr.mxu0 0.0
    %1011 = vmatpush1.msra.mxu0 0.0
    %1012 = vmatprep.subr.mxu0 0.0
    %1013 = vmatpush1.msra.mxu0 0.0
    %1014 = vmatprep.subr.mxu0 0.0
    %1015 = vmatpush1.msra.mxu0 0.0
    %1016 = vmatprep.mubr.f32.mxu0 0.0
    %1017 = vmatmul.mubr.f32.gmra.mrb[0].mxu0 %v929
    %v1018 = vpop.f32.mrb[0].mxu0
    %v1019 = vadd.f32 %v890, %v1018
    %v1020 = vpop.f32.mrb[0].mxu0
    %1021 = vmatprep.mubr.f32.mxu0 0.0
    %1022 = vmatmul.mubr.f32.gmra.mrb[0].mxu0 %v932
    %v1023 = vpop.f32.mrb[0].mxu0
    %v1024 = vadd.f32 %v895, %v1023
    %v1025 = vpop.f32.mrb[0].mxu0
    %1026 = vmatprep.mubr.f32.mxu0 0.0
    %1027 = vmatmul.mubr.f32.gmra.mrb[0].mxu0 %v935
    %v1028 = vpop.f32.mrb[0].mxu0
    %v1029 = vadd.f32 %v900, %v1028
    %v1030 = vpop.f32.mrb[0].mxu0
    %1031 = vmatprep.mubr.f32.mxu0 0.0
    %1032 = vmatmul.mubr.f32.gmra.mrb[0].mxu0 %v938
    %v1033 = vpop.f32.mrb[0].mxu0
    %v1034 = vadd.f32 %v905, %v1033
    %v1035 = vpop.f32.mrb[0].mxu0
    %1036 = vmatprep.mubr.f32.mxu0 0.0
    %1037 = vmatmul.mubr.f32.gmra.mrb[0].mxu0 %v941
    %v1038 = vpop.f32.mrb[0].mxu0
    %v1039 = vadd.f32 %v910, %v1038
    %v1040 = vpop.f32.mrb[0].mxu0
    %1041 = vmatprep.mubr.f32.mxu0 0.0
    %1042 = vmatmul.mubr.f32.gmra.mrb[0].mxu0 %v944
    %v1043 = vpop.f32.mrb[0].mxu0
    %v1044 = vadd.f32 %v915, %v1043
    %v1045 = vpop.f32.mrb[0].mxu0
    %1046 = vmatprep.mubr.f32.mxu0 0.0
    %1047 = vmatmul.mubr.f32.gmra.mrb[0].mxu0 %v947
    %v1048 = vpop.f32.mrb[0].mxu0
    %v1049 = vadd.f32 %v920, %v1048
    %v1050 = vpop.f32.mrb[0].mxu0
    %1051 = vmatprep.mubr.f32.mxu0 0.0
    %1052 = vmatmul.mubr.f32.gmra.mrb[0].mxu0 %v950
    %v1053 = vpop.f32.mrb[0].mxu0
    %v1054 = vadd.f32 %v925, %v1053
    %v1055 = vpop.f32.mrb[0].mxu0
    %1056 = vdwg.mxu0
    %v1057 = vld [vmem:[%s4 + $0x40] sm:$0xff]
    %v1058 = vld [vmem:[%s4 + $0x48] sm:$0xff]
    %v1059 = vld [vmem:[%s4 + $0x50] sm:$0xff]
    %v1060 = vld [vmem:[%s4 + $0x58] sm:$0xff]
    %v1062 = vsel %vm607, %v783, 0
    %v1065 = vsel %vm607, %v784, 0
    %v1068 = vsel %vm607, %v785, 0
    %v1071 = vsel %vm607, %v786, 0
    %v1074 = vsel %vm607, %v787, 0
    %v1077 = vsel %vm607, %v788, 0
    %v1080 = vsel %vm607, %v789, 0
    %v1083 = vsel %vm607, %v790, 0
    %1085 = vmatprep.subr.mxu0 0.0
    %1086 = vmatpush1.msra.mxu0 %v1057
    %1087 = vmatprep.subr.mxu0 0.0
    %1088 = vmatpush1.msra.mxu0 %v1058
    %1089 = vmatprep.subr.mxu0 0.0
    %1090 = vmatpush1.msra.mxu0 %v1059
    %1091 = vmatprep.subr.mxu0 0.0
    %1092 = vmatpush1.msra.mxu0 %v1060
    %1093 = vmatprep.subr.mxu0 0.0
    %1094 = vmatpush1.msra.mxu0 0.0
    %1095 = vmatprep.subr.mxu0 0.0
    %1096 = vmatpush1.msra.mxu0 0.0
    %1097 = vmatprep.subr.mxu0 0.0
    %1098 = vmatpush1.msra.mxu0 0.0
    %1099 = vmatprep.subr.mxu0 0.0
    %1100 = vmatpush1.msra.mxu0 0.0
    %1101 = vmatprep.subr.mxu0 0.0
    %1102 = vmatpush1.msra.mxu0 0.0
    %1103 = vmatprep.subr.mxu0 0.0
    %1104 = vmatpush1.msra.mxu0 0.0
    %1105 = vmatprep.subr.mxu0 0.0
    %1106 = vmatpush1.msra.mxu0 0.0
    %1107 = vmatprep.subr.mxu0 0.0
    %1108 = vmatpush1.msra.mxu0 0.0
    %1109 = vmatprep.subr.mxu0 0.0
    %1110 = vmatpush1.msra.mxu0 0.0
    %1111 = vmatprep.subr.mxu0 0.0
    %1112 = vmatpush1.msra.mxu0 0.0
    %1113 = vmatprep.subr.mxu0 0.0
    %1114 = vmatpush1.msra.mxu0 0.0
    %1115 = vmatprep.subr.mxu0 0.0
    %1116 = vmatpush1.msra.mxu0 0.0
    %1117 = vmatprep.subr.mxu0 0.0
    %1118 = vmatpush1.msra.mxu0 0.0
    %1119 = vmatprep.subr.mxu0 0.0
    %1120 = vmatpush1.msra.mxu0 0.0
    %1121 = vmatprep.subr.mxu0 0.0
    %1122 = vmatpush1.msra.mxu0 0.0
    %1123 = vmatprep.subr.mxu0 0.0
    %1124 = vmatpush1.msra.mxu0 0.0
    %1125 = vmatprep.subr.mxu0 0.0
    %1126 = vmatpush1.msra.mxu0 0.0
    %1127 = vmatprep.subr.mxu0 0.0
    %1128 = vmatpush1.msra.mxu0 0.0
    %1129 = vmatprep.subr.mxu0 0.0
    %1130 = vmatpush1.msra.mxu0 0.0
    %1131 = vmatprep.subr.mxu0 0.0
    %1132 = vmatpush1.msra.mxu0 0.0
    %1133 = vmatprep.subr.mxu0 0.0
    %1134 = vmatpush1.msra.mxu0 0.0
    %1135 = vmatprep.subr.mxu0 0.0
    %1136 = vmatpush1.msra.mxu0 0.0
    %1137 = vmatprep.subr.mxu0 0.0
    %1138 = vmatpush1.msra.mxu0 0.0
    %1139 = vmatprep.subr.mxu0 0.0
    %1140 = vmatpush1.msra.mxu0 0.0
    %1141 = vmatprep.subr.mxu0 0.0
    %1142 = vmatpush1.msra.mxu0 0.0
    %1143 = vmatprep.subr.mxu0 0.0
    %1144 = vmatpush1.msra.mxu0 0.0
    %1145 = vmatprep.subr.mxu0 0.0
    %1146 = vmatpush1.msra.mxu0 0.0
    %1147 = vmatprep.subr.mxu0 0.0
    %1148 = vmatpush1.msra.mxu0 0.0
    %1149 = vmatprep.mubr.f32.mxu0 0.0
    %1150 = vmatmul.mubr.f32.gmra.mrb[0].mxu0 %v1062
    %v1151 = vpop.f32.mrb[0].mxu0
    %v1152 = vadd.f32 0.0, %v1151
    %v1153 = vpop.f32.mrb[0].mxu0
    %1154 = vmatprep.mubr.f32.mxu0 0.0
    %1155 = vmatmul.mubr.f32.gmra.mrb[0].mxu0 %v1065
    %v1156 = vpop.f32.mrb[0].mxu0
    %v1157 = vadd.f32 0.0, %v1156
    %v1158 = vpop.f32.mrb[0].mxu0
    %1159 = vmatprep.mubr.f32.mxu0 0.0
    %1160 = vmatmul.mubr.f32.gmra.mrb[0].mxu0 %v1068
    %v1161 = vpop.f32.mrb[0].mxu0
    %v1162 = vadd.f32 0.0, %v1161
    %v1163 = vpop.f32.mrb[0].mxu0
    %1164 = vmatprep.mubr.f32.mxu0 0.0
    %1165 = vmatmul.mubr.f32.gmra.mrb[0].mxu0 %v1071
    %v1166 = vpop.f32.mrb[0].mxu0
    %v1167 = vadd.f32 0.0, %v1166
    %v1168 = vpop.f32.mrb[0].mxu0
    %1169 = vmatprep.mubr.f32.mxu0 0.0
    %1170 = vmatmul.mubr.f32.gmra.mrb[0].mxu0 %v1074
    %v1171 = vpop.f32.mrb[0].mxu0
    %v1172 = vadd.f32 0.0, %v1171
    %v1173 = vpop.f32.mrb[0].mxu0
    %1174 = vmatprep.mubr.f32.mxu0 0.0
    %1175 = vmatmul.mubr.f32.gmra.mrb[0].mxu0 %v1077
    %v1176 = vpop.f32.mrb[0].mxu0
    %v1177 = vadd.f32 0.0, %v1176
    %v1178 = vpop.f32.mrb[0].mxu0
    %1179 = vmatprep.mubr.f32.mxu0 0.0
    %1180 = vmatmul.mubr.f32.gmra.mrb[0].mxu0 %v1080
    %v1181 = vpop.f32.mrb[0].mxu0
    %v1182 = vadd.f32 0.0, %v1181
    %v1183 = vpop.f32.mrb[0].mxu0
    %1184 = vmatprep.mubr.f32.mxu0 0.0
    %1185 = vmatmul.mubr.f32.gmra.mrb[0].mxu0 %v1083
    %v1186 = vpop.f32.mrb[0].mxu0
    %v1187 = vadd.f32 0.0, %v1186
    %v1188 = vpop.f32.mrb[0].mxu0
    %1189 = vdwg.mxu0
    %v1190 = vadd.f32 %v1019, %v1152
    %v1191 = vadd.f32 %v1024, %v1157
    %v1192 = vadd.f32 %v1029, %v1162
    %v1193 = vadd.f32 %v1034, %v1167
    %v1194 = vadd.f32 %v1039, %v1172
    %v1195 = vadd.f32 %v1044, %v1177
    %v1196 = vadd.f32 %v1049, %v1182
    %v1197 = vadd.f32 %v1054, %v1187
    %v1198 = vld [vmem:[%s5] sm:$0x1]
    %v1200 = vlaneseq
    %v1201 = vshrl.u32 %v1200, 7
    %v1202 = vsub.s32 0, %v1201
    %v1203 = vrot.slane %v1198, %v1202
    %v1205 = vadd.f32 %v1190, %v1203
    %v1206 = vadd.f32 %v1191, %v1203
    %v1207 = vadd.f32 %v1192, %v1203
    %v1208 = vadd.f32 %v1193, %v1203
    %v1209 = vadd.f32 %v1194, %v1203
    %v1210 = vadd.f32 %v1195, %v1203
    %v1211 = vadd.f32 %v1196, %v1203
    %v1212 = vadd.f32 %v1197, %v1203
    %v1213 = vmax.f32 %v1205, 0.0
    %v1214 = vmax.f32 %v1206, 0.0
    %v1215 = vmax.f32 %v1207, 0.0
    %v1216 = vmax.f32 %v1208, 0.0
    %v1217 = vmax.f32 %v1209, 0.0
    %v1218 = vmax.f32 %v1210, 0.0
    %v1219 = vmax.f32 %v1211, 0.0
    %v1220 = vmax.f32 %v1212, 0.0
    %vm1221 = vcmask 523264
    %1222 = vst.msk [vmem:[#allocation3] sm:$0xff] %vm1221, %v1213
    %1223 = vst.msk [vmem:[#allocation3 + $0x8] sm:$0xff] %vm1221, %v1214
    %1224 = vst.msk [vmem:[#allocation3 + $0x10] sm:$0xff] %vm1221, %v1215
    %1225 = vst.msk [vmem:[#allocation3 + $0x18] sm:$0xff] %vm1221, %v1216
    %1226 = vst.msk [vmem:[#allocation3 + $0x20] sm:$0xff] %vm1221, %v1217
    %1227 = vst.msk [vmem:[#allocation3 + $0x28] sm:$0xff] %vm1221, %v1218
    %1228 = vst.msk [vmem:[#allocation3 + $0x30] sm:$0xff] %vm1221, %v1219
    %1229 = vst.msk [vmem:[#allocation3 + $0x38] sm:$0xff] %vm1221, %v1220
    %v1230 = vld [vmem:[#allocation3] ss:$2 sm:$0xff]
    %s1231 = scalar_lea.vmem [#allocation3], 16
    %v1232 = vld [vmem:[%s1231] ss:$2 sm:$0xff]
    %s1233 = scalar_lea.vmem [#allocation3], 32
    %v1234 = vld [vmem:[%s1233] ss:$2 sm:$0xff]
    %s1235 = scalar_lea.vmem [#allocation3], 48
    %v1236 = vld [vmem:[%s1235] ss:$2 sm:$0xff]
    %v1237 = vld [vmem:[%s639] ss:$2 sm:$0xff]
    %v1238 = vld [vmem:[%s641] ss:$2 sm:$0xff]
    %v1239 = vld [vmem:[%s643] ss:$2 sm:$0xff]
    %v1240 = vld [vmem:[%s645] ss:$2 sm:$0xff]
    %v1241 = vmax.f32 %v1230, %v1237
    %v1242 = vmax.f32 %v1232, %v1238
    %v1243 = vmax.f32 %v1234, %v1239
    %v1244 = vmax.f32 %v1236, %v1240
    %1245 = vst.msk [vmem:[#allocation2 + $0x8] sm:$0xff] %vm1221, %v1241
    %1246 = vst.msk [vmem:[#allocation2 + $0x10] sm:$0xff] %vm1221, %v1242
    %1247 = vst.msk [vmem:[#allocation2 + $0x18] sm:$0xff] %vm1221, %v1243
    %1248 = vst.msk [vmem:[#allocation2 + $0x20] sm:$0xff] %vm1221, %v1244
    %v1249 = vld [vmem:[#allocation2 + $0x7] sm:$0xff]
    %v1250 = vld [vmem:[#allocation2 + $0xf] sm:$0xff]
    %v1251 = vld [vmem:[#allocation2 + $0x17] sm:$0xff]
    %v1252 = vld [vmem:[#allocation2 + $0x1f] sm:$0xff]
    %v1253 = vld [vmem:[#allocation2 + $0x9] sm:$0xff]
    %v1254 = vld [vmem:[#allocation2 + $0x11] sm:$0xff]
    %v1255 = vld [vmem:[#allocation2 + $0x19] sm:$0xff]
    %v1256 = vld [vmem:[#allocation2 + $0x21] sm:$0xff]
    %v1257 = vld [vmem:[%s1] sm:$0xff]
    %v1258 = vld [vmem:[%s1 + $0x8] sm:$0xff]
    %v1259 = vld [vmem:[%s1 + $0x10] sm:$0xff]
    %v1260 = vld [vmem:[%s1 + $0x18] sm:$0xff]
    %vm1261 = vcmp.gt.f32.partialorder %v1257, 0.0
    %vm1262 = vcmp.gt.f32.partialorder %v1258, 0.0
    %vm1263 = vcmp.gt.f32.partialorder %v1259, 0.0
    %vm1264 = vcmp.gt.f32.partialorder %v1260, 0.0
    %v1265 = vsel %vm1261, 1, 0
    %v1266 = vsel %vm1262, 1, 0
    %v1267 = vsel %vm1263, 1, 0
    %v1268 = vsel %vm1264, 1, 0
    %1269 = vset.pattern.permute.xlu0 4
    %1270 = vperm.xlu0 %1269, %v1265
    %v1271 = vpop.permute.xlu0 %1270
    %1272 = vset.pattern.permute.xlu0 4
    %1273 = vperm.xlu0 %1272, %v1266
    %v1274 = vpop.permute.xlu0 %1273
    %1275 = vset.pattern.permute.xlu0 4
    %1276 = vperm.xlu0 %1275, %v1267
    %v1277 = vpop.permute.xlu0 %1276
    %1278 = vset.pattern.permute.xlu0 4
    %1279 = vperm.xlu0 %1278, %v1268
    %v1280 = vpop.permute.xlu0 %1279
    %vm1281 = vcmp.eq.s32.totalorder %v1271, 1
    %vm1282 = vcmp.eq.s32.totalorder %v1274, 1
    %vm1283 = vcmp.eq.s32.totalorder %v1277, 1
    %vm1284 = vcmp.eq.s32.totalorder %v1280, 1
    %v1285 = vsel %vm1281, 0.0, %v1249
    %v1286 = vsel %vm1282, 0.0, %v1250
    %v1287 = vsel %vm1283, 0.0, %v1251
    %v1288 = vsel %vm1284, 0.0, %v1252
    %1289 = vset.pattern.permute.xlu0 5
    %1290 = vperm.xlu0 %1289, %v1265
    %v1291 = vpop.permute.xlu0 %1290
    %1292 = vset.pattern.permute.xlu0 5
    %1293 = vperm.xlu0 %1292, %v1266
    %v1294 = vpop.permute.xlu0 %1293
    %1295 = vset.pattern.permute.xlu0 5
    %1296 = vperm.xlu0 %1295, %v1267
    %v1297 = vpop.permute.xlu0 %1296
    %1298 = vset.pattern.permute.xlu0 5
    %1299 = vperm.xlu0 %1298, %v1268
    %v1300 = vpop.permute.xlu0 %1299
    %vm1301 = vcmp.eq.s32.totalorder %v1291, 1
    %vm1302 = vcmp.eq.s32.totalorder %v1294, 1
    %vm1303 = vcmp.eq.s32.totalorder %v1297, 1
    %vm1304 = vcmp.eq.s32.totalorder %v1300, 1
    %v1305 = vsel %vm1301, 0.0, %v1253
    %v1306 = vsel %vm1302, 0.0, %v1254
    %v1307 = vsel %vm1303, 0.0, %v1255
    %v1308 = vsel %vm1304, 0.0, %v1256
    %v1309 = vld [vmem:[%s6] sm:$0xff]
    %v1310 = vld [vmem:[%s6 + $0x8] sm:$0xff]
    %v1311 = vld [vmem:[%s6 + $0x10] sm:$0xff]
    %v1312 = vld [vmem:[%s6 + $0x18] sm:$0xff]
    %v1313 = vld [vmem:[%s6 + $0x20] sm:$0xff]
    %v1314 = vld [vmem:[%s6 + $0x28] sm:$0xff]
    %v1315 = vld [vmem:[%s6 + $0x30] sm:$0xff]
    %v1316 = vld [vmem:[%s6 + $0x38] sm:$0xff]
    %v1317 = vld [vmem:[%s6 + $0x40] sm:$0xff]
    %v1318 = vld [vmem:[%s6 + $0x48] sm:$0xff]
    %v1319 = vld [vmem:[%s6 + $0x50] sm:$0xff]
    %v1320 = vld [vmem:[%s6 + $0x58] sm:$0xff]
    %v1321 = vld [vmem:[%s6 + $0x60] sm:$0xff]
    %v1322 = vld [vmem:[%s6 + $0x68] sm:$0xff]
    %v1323 = vld [vmem:[%s6 + $0x70] sm:$0xff]
    %v1324 = vld [vmem:[%s6 + $0x78] sm:$0xff]
    %v1326 = vsel %vm1221, %v1241, 0
    %v1329 = vsel %vm1221, %v1242, 0
    %v1332 = vsel %vm1221, %v1243, 0
    %v1335 = vsel %vm1221, %v1244, 0
    %1337 = vmatprep.subr.mxu0 0.0
    %1338 = vmatpush1.msra.mxu0 %v1317
    %1339 = vmatprep.subr.mxu0 0.0
    %1340 = vmatpush1.msra.mxu0 %v1318
    %1341 = vmatprep.subr.mxu0 0.0
    %1342 = vmatpush1.msra.mxu0 %v1319
    %1343 = vmatprep.subr.mxu0 0.0
    %1344 = vmatpush1.msra.mxu0 %v1320
    %1345 = vmatprep.subr.mxu0 0.0
    %1346 = vmatpush1.msra.mxu0 %v1321
    %1347 = vmatprep.subr.mxu0 0.0
    %1348 = vmatpush1.msra.mxu0 %v1322
    %1349 = vmatprep.subr.mxu0 0.0
    %1350 = vmatpush1.msra.mxu0 %v1323
    %1351 = vmatprep.subr.mxu0 0.0
    %1352 = vmatpush1.msra.mxu0 %v1324
    %1353 = vmatprep.subr.mxu0 0.0
    %1354 = vmatpush1.msra.mxu0 0.0
    %1355 = vmatprep.subr.mxu0 0.0
    %1356 = vmatpush1.msra.mxu0 0.0
    %1357 = vmatprep.subr.mxu0 0.0
    %1358 = vmatpush1.msra.mxu0 0.0
    %1359 = vmatprep.subr.mxu0 0.0
    %1360 = vmatpush1.msra.mxu0 0.0
    %1361 = vmatprep.subr.mxu0 0.0
    %1362 = vmatpush1.msra.mxu0 0.0
    %1363 = vmatprep.subr.mxu0 0.0
    %1364 = vmatpush1.msra.mxu0 0.0
    %1365 = vmatprep.subr.mxu0 0.0
    %1366 = vmatpush1.msra.mxu0 0.0
    %1367 = vmatprep.subr.mxu0 0.0
    %1368 = vmatpush1.msra.mxu0 0.0
    %1369 = vmatprep.subr.mxu0 0.0
    %1370 = vmatpush1.msra.mxu0 0.0
    %1371 = vmatprep.subr.mxu0 0.0
    %1372 = vmatpush1.msra.mxu0 0.0
    %1373 = vmatprep.subr.mxu0 0.0
    %1374 = vmatpush1.msra.mxu0 0.0
    %1375 = vmatprep.subr.mxu0 0.0
    %1376 = vmatpush1.msra.mxu0 0.0
    %1377 = vmatprep.subr.mxu0 0.0
    %1378 = vmatpush1.msra.mxu0 0.0
    %1379 = vmatprep.subr.mxu0 0.0
    %1380 = vmatpush1.msra.mxu0 0.0
    %1381 = vmatprep.subr.mxu0 0.0
    %1382 = vmatpush1.msra.mxu0 0.0
    %1383 = vmatprep.subr.mxu0 0.0
    %1384 = vmatpush1.msra.mxu0 0.0
    %1385 = vmatprep.subr.mxu0 0.0
    %1386 = vmatpush1.msra.mxu0 0.0
    %1387 = vmatprep.subr.mxu0 0.0
    %1388 = vmatpush1.msra.mxu0 0.0
    %1389 = vmatprep.subr.mxu0 0.0
    %1390 = vmatpush1.msra.mxu0 0.0
    %1391 = vmatprep.subr.mxu0 0.0
    %1392 = vmatpush1.msra.mxu0 0.0
    %1393 = vmatprep.subr.mxu0 0.0
    %1394 = vmatpush1.msra.mxu0 0.0
    %1395 = vmatprep.subr.mxu0 0.0
    %1396 = vmatpush1.msra.mxu0 0.0
    %1397 = vmatprep.subr.mxu0 0.0
    %1398 = vmatpush1.msra.mxu0 0.0
    %1399 = vmatprep.subr.mxu0 0.0
    %1400 = vmatpush1.msra.mxu0 0.0
    %1401 = vmatprep.mubr.f32.mxu0 0.0
    %1402 = vmatmul.mubr.f32.gmra.mrb[0].mxu0 %v1326
    %v1403 = vpop.f32.mrb[0].mxu0
    %v1404 = vadd.f32 0.0, %v1403
    %v1405 = vpop.f32.mrb[0].mxu0
    %1406 = vmatprep.mubr.f32.mxu0 0.0
    %1407 = vmatmul.mubr.f32.gmra.mrb[0].mxu0 %v1329
    %v1408 = vpop.f32.mrb[0].mxu0
    %v1409 = vadd.f32 0.0, %v1408
    %v1410 = vpop.f32.mrb[0].mxu0
    %1411 = vmatprep.mubr.f32.mxu0 0.0
    %1412 = vmatmul.mubr.f32.gmra.mrb[0].mxu0 %v1332
    %v1413 = vpop.f32.mrb[0].mxu0
    %v1414 = vadd.f32 0.0, %v1413
    %v1415 = vpop.f32.mrb[0].mxu0
    %1416 = vmatprep.mubr.f32.mxu0 0.0
    %1417 = vmatmul.mubr.f32.gmra.mrb[0].mxu0 %v1335
    %v1418 = vpop.f32.mrb[0].mxu0
    %v1419 = vadd.f32 0.0, %v1418
    %v1420 = vpop.f32.mrb[0].mxu0
    %1421 = vdwg.mxu0
    %v1423 = vsel %vm1221, %v1285, 0
    %v1426 = vsel %vm1221, %v1286, 0
    %v1429 = vsel %vm1221, %v1287, 0
    %v1432 = vsel %vm1221, %v1288, 0
    %1434 = vmatprep.subr.mxu0 0.0
    %1435 = vmatpush1.msra.mxu0 %v1309
    %1436 = vmatprep.subr.mxu0 0.0
    %1437 = vmatpush1.msra.mxu0 %v1310
    %1438 = vmatprep.subr.mxu0 0.0
    %1439 = vmatpush1.msra.mxu0 %v1311
    %1440 = vmatprep.subr.mxu0 0.0
    %1441 = vmatpush1.msra.mxu0 %v1312
    %1442 = vmatprep.subr.mxu0 0.0
    %1443 = vmatpush1.msra.mxu0 %v1313
    %1444 = vmatprep.subr.mxu0 0.0
    %1445 = vmatpush1.msra.mxu0 %v1314
    %1446 = vmatprep.subr.mxu0 0.0
    %1447 = vmatpush1.msra.mxu0 %v1315
    %1448 = vmatprep.subr.mxu0 0.0
    %1449 = vmatpush1.msra.mxu0 %v1316
    %1450 = vmatprep.subr.mxu0 0.0
    %1451 = vmatpush1.msra.mxu0 0.0
    %1452 = vmatprep.subr.mxu0 0.0
    %1453 = vmatpush1.msra.mxu0 0.0
    %1454 = vmatprep.subr.mxu0 0.0
    %1455 = vmatpush1.msra.mxu0 0.0
    %1456 = vmatprep.subr.mxu0 0.0
    %1457 = vmatpush1.msra.mxu0 0.0
    %1458 = vmatprep.subr.mxu0 0.0
    %1459 = vmatpush1.msra.mxu0 0.0
    %1460 = vmatprep.subr.mxu0 0.0
    %1461 = vmatpush1.msra.mxu0 0.0
    %1462 = vmatprep.subr.mxu0 0.0
    %1463 = vmatpush1.msra.mxu0 0.0
    %1464 = vmatprep.subr.mxu0 0.0
    %1465 = vmatpush1.msra.mxu0 0.0
    %1466 = vmatprep.subr.mxu0 0.0
    %1467 = vmatpush1.msra.mxu0 0.0
    %1468 = vmatprep.subr.mxu0 0.0
    %1469 = vmatpush1.msra.mxu0 0.0
    %1470 = vmatprep.subr.mxu0 0.0
    %1471 = vmatpush1.msra.mxu0 0.0
    %1472 = vmatprep.subr.mxu0 0.0
    %1473 = vmatpush1.msra.mxu0 0.0
    %1474 = vmatprep.subr.mxu0 0.0
    %1475 = vmatpush1.msra.mxu0 0.0
    %1476 = vmatprep.subr.mxu0 0.0
    %1477 = vmatpush1.msra.mxu0 0.0
    %1478 = vmatprep.subr.mxu0 0.0
    %1479 = vmatpush1.msra.mxu0 0.0
    %1480 = vmatprep.subr.mxu0 0.0
    %1481 = vmatpush1.msra.mxu0 0.0
    %1482 = vmatprep.subr.mxu0 0.0
    %1483 = vmatpush1.msra.mxu0 0.0
    %1484 = vmatprep.subr.mxu0 0.0
    %1485 = vmatpush1.msra.mxu0 0.0
    %1486 = vmatprep.subr.mxu0 0.0
    %1487 = vmatpush1.msra.mxu0 0.0
    %1488 = vmatprep.subr.mxu0 0.0
    %1489 = vmatpush1.msra.mxu0 0.0
    %1490 = vmatprep.subr.mxu0 0.0
    %1491 = vmatpush1.msra.mxu0 0.0
    %1492 = vmatprep.subr.mxu0 0.0
    %1493 = vmatpush1.msra.mxu0 0.0
    %1494 = vmatprep.subr.mxu0 0.0
    %1495 = vmatpush1.msra.mxu0 0.0
    %1496 = vmatprep.subr.mxu0 0.0
    %1497 = vmatpush1.msra.mxu0 0.0
    %1498 = vmatprep.mubr.f32.mxu0 0.0
    %1499 = vmatmul.mubr.f32.gmra.mrb[0].mxu0 %v1423
    %v1500 = vpop.f32.mrb[0].mxu0
    %v1501 = vadd.f32 %v1404, %v1500
    %v1502 = vpop.f32.mrb[0].mxu0
    %1503 = vmatprep.mubr.f32.mxu0 0.0
    %1504 = vmatmul.mubr.f32.gmra.mrb[0].mxu0 %v1426
    %v1505 = vpop.f32.mrb[0].mxu0
    %v1506 = vadd.f32 %v1409, %v1505
    %v1507 = vpop.f32.mrb[0].mxu0
    %1508 = vmatprep.mubr.f32.mxu0 0.0
    %1509 = vmatmul.mubr.f32.gmra.mrb[0].mxu0 %v1429
    %v1510 = vpop.f32.mrb[0].mxu0
    %v1511 = vadd.f32 %v1414, %v1510
    %v1512 = vpop.f32.mrb[0].mxu0
    %1513 = vmatprep.mubr.f32.mxu0 0.0
    %1514 = vmatmul.mubr.f32.gmra.mrb[0].mxu0 %v1432
    %v1515 = vpop.f32.mrb[0].mxu0
    %v1516 = vadd.f32 %v1419, %v1515
    %v1517 = vpop.f32.mrb[0].mxu0
    %1518 = vdwg.mxu0
    %v1519 = vld [vmem:[%s6 + $0x80] sm:$0xff]
    %v1520 = vld [vmem:[%s6 + $0x88] sm:$0xff]
    %v1521 = vld [vmem:[%s6 + $0x90] sm:$0xff]
    %v1522 = vld [vmem:[%s6 + $0x98] sm:$0xff]
    %v1523 = vld [vmem:[%s6 + $0xa0] sm:$0xff]
    %v1524 = vld [vmem:[%s6 + $0xa8] sm:$0xff]
    %v1525 = vld [vmem:[%s6 + $0xb0] sm:$0xff]
    %v1526 = vld [vmem:[%s6 + $0xb8] sm:$0xff]
    %v1528 = vsel %vm1221, %v1305, 0
    %v1531 = vsel %vm1221, %v1306, 0
    %v1534 = vsel %vm1221, %v1307, 0
    %v1537 = vsel %vm1221, %v1308, 0
    %1539 = vmatprep.subr.mxu0 0.0
    %1540 = vmatpush1.msra.mxu0 %v1519
    %1541 = vmatprep.subr.mxu0 0.0
    %1542 = vmatpush1.msra.mxu0 %v1520
    %1543 = vmatprep.subr.mxu0 0.0
    %1544 = vmatpush1.msra.mxu0 %v1521
    %1545 = vmatprep.subr.mxu0 0.0
    %1546 = vmatpush1.msra.mxu0 %v1522
    %1547 = vmatprep.subr.mxu0 0.0
    %1548 = vmatpush1.msra.mxu0 %v1523
    %1549 = vmatprep.subr.mxu0 0.0
    %1550 = vmatpush1.msra.mxu0 %v1524
    %1551 = vmatprep.subr.mxu0 0.0
    %1552 = vmatpush1.msra.mxu0 %v1525
    %1553 = vmatprep.subr.mxu0 0.0
    %1554 = vmatpush1.msra.mxu0 %v1526
    %1555 = vmatprep.subr.mxu0 0.0
    %1556 = vmatpush1.msra.mxu0 0.0
    %1557 = vmatprep.subr.mxu0 0.0
    %1558 = vmatpush1.msra.mxu0 0.0
    %1559 = vmatprep.subr.mxu0 0.0
    %1560 = vmatpush1.msra.mxu0 0.0
    %1561 = vmatprep.subr.mxu0 0.0
    %1562 = vmatpush1.msra.mxu0 0.0
    %1563 = vmatprep.subr.mxu0 0.0
    %1564 = vmatpush1.msra.mxu0 0.0
    %1565 = vmatprep.subr.mxu0 0.0
    %1566 = vmatpush1.msra.mxu0 0.0
    %1567 = vmatprep.subr.mxu0 0.0
    %1568 = vmatpush1.msra.mxu0 0.0
    %1569 = vmatprep.subr.mxu0 0.0
    %1570 = vmatpush1.msra.mxu0 0.0
    %1571 = vmatprep.subr.mxu0 0.0
    %1572 = vmatpush1.msra.mxu0 0.0
    %1573 = vmatprep.subr.mxu0 0.0
    %1574 = vmatpush1.msra.mxu0 0.0
    %1575 = vmatprep.subr.mxu0 0.0
    %1576 = vmatpush1.msra.mxu0 0.0
    %1577 = vmatprep.subr.mxu0 0.0
    %1578 = vmatpush1.msra.mxu0 0.0
    %1579 = vmatprep.subr.mxu0 0.0
    %1580 = vmatpush1.msra.mxu0 0.0
    %1581 = vmatprep.subr.mxu0 0.0
    %1582 = vmatpush1.msra.mxu0 0.0
    %1583 = vmatprep.subr.mxu0 0.0
    %1584 = vmatpush1.msra.mxu0 0.0
    %1585 = vmatprep.subr.mxu0 0.0
    %1586 = vmatpush1.msra.mxu0 0.0
    %1587 = vmatprep.subr.mxu0 0.0
    %1588 = vmatpush1.msra.mxu0 0.0
    %1589 = vmatprep.subr.mxu0 0.0
    %1590 = vmatpush1.msra.mxu0 0.0
    %1591 = vmatprep.subr.mxu0 0.0
    %1592 = vmatpush1.msra.mxu0 0.0
    %1593 = vmatprep.subr.mxu0 0.0
    %1594 = vmatpush1.msra.mxu0 0.0
    %1595 = vmatprep.subr.mxu0 0.0
    %1596 = vmatpush1.msra.mxu0 0.0
    %1597 = vmatprep.subr.mxu0 0.0
    %1598 = vmatpush1.msra.mxu0 0.0
    %1599 = vmatprep.subr.mxu0 0.0
    %1600 = vmatpush1.msra.mxu0 0.0
    %1601 = vmatprep.subr.mxu0 0.0
    %1602 = vmatpush1.msra.mxu0 0.0
    %1603 = vmatprep.mubr.f32.mxu0 0.0
    %1604 = vmatmul.mubr.f32.gmra.mrb[0].mxu0 %v1528
    %v1605 = vpop.f32.mrb[0].mxu0
    %v1606 = vadd.f32 0.0, %v1605
    %v1607 = vpop.f32.mrb[0].mxu0
    %1608 = vmatprep.mubr.f32.mxu0 0.0
    %1609 = vmatmul.mubr.f32.gmra.mrb[0].mxu0 %v1531
    %v1610 = vpop.f32.mrb[0].mxu0
    %v1611 = vadd.f32 0.0, %v1610
    %v1612 = vpop.f32.mrb[0].mxu0
    %1613 = vmatprep.mubr.f32.mxu0 0.0
    %1614 = vmatmul.mubr.f32.gmra.mrb[0].mxu0 %v1534
    %v1615 = vpop.f32.mrb[0].mxu0
    %v1616 = vadd.f32 0.0, %v1615
    %v1617 = vpop.f32.mrb[0].mxu0
    %1618 = vmatprep.mubr.f32.mxu0 0.0
    %1619 = vmatmul.mubr.f32.gmra.mrb[0].mxu0 %v1537
    %v1620 = vpop.f32.mrb[0].mxu0
    %v1621 = vadd.f32 0.0, %v1620
    %v1622 = vpop.f32.mrb[0].mxu0
    %1623 = vdwg.mxu0
    %v1624 = vadd.f32 %v1501, %v1606
    %v1625 = vadd.f32 %v1506, %v1611
    %v1626 = vadd.f32 %v1511, %v1616
    %v1627 = vadd.f32 %v1516, %v1621
    %v1628 = vld [vmem:[%s7] sm:$0x1]
    %v1630 = vlaneseq
    %v1631 = vshrl.u32 %v1630, 7
    %v1632 = vsub.s32 0, %v1631
    %v1633 = vrot.slane %v1628, %v1632
    %v1635 = vadd.f32 %v1624, %v1633
    %v1636 = vadd.f32 %v1625, %v1633
    %v1637 = vadd.f32 %v1626, %v1633
    %v1638 = vadd.f32 %v1627, %v1633
    %v1639 = vmax.f32 %v1635, 0.0
    %v1640 = vmax.f32 %v1636, 0.0
    %v1641 = vmax.f32 %v1637, 0.0
    %v1642 = vmax.f32 %v1638, 0.0
    %1643 = vst [vmem:[#allocation3] sm:$0xff] %v1639
    %1644 = vst [vmem:[#allocation3 + $0x8] sm:$0xff] %v1640
    %1645 = vst [vmem:[#allocation3 + $0x10] sm:$0xff] %v1641
    %1646 = vst [vmem:[#allocation3 + $0x18] sm:$0xff] %v1642
    %v1647 = vld [vmem:[#allocation3] ss:$4 sm:$0xff]
    %v1648 = vld [vmem:[%s639] ss:$4 sm:$0xff]
    %v1649 = vmax.f32 %v1647, %v1648
    %v1650 = vld [vmem:[%s8] sm:$0xff]
    %v1651 = vld [vmem:[%s8 + $0x8] sm:$0xff]
    %v1652 = vld [vmem:[%s8 + $0x10] sm:$0xff]
    %v1653 = vld [vmem:[%s8 + $0x18] sm:$0xff]
    %v1654 = vld [vmem:[%s8 + $0x20] sm:$0xff]
    %v1655 = vld [vmem:[%s8 + $0x28] sm:$0xff]
    %v1656 = vld [vmem:[%s8 + $0x30] sm:$0xff]
    %v1657 = vld [vmem:[%s8 + $0x38] sm:$0xff]
    %v1658 = vld [vmem:[%s8 + $0x40] sm:$0xff]
    %v1659 = vld [vmem:[%s8 + $0x48] sm:$0xff]
    %v1660 = vld [vmem:[%s8 + $0x50] sm:$0xff]
    %v1661 = vld [vmem:[%s8 + $0x58] sm:$0xff]
    %v1662 = vld [vmem:[%s8 + $0x60] sm:$0xff]
    %v1663 = vld [vmem:[%s8 + $0x68] sm:$0xff]
    %v1664 = vld [vmem:[%s8 + $0x70] sm:$0xff]
    %v1665 = vld [vmem:[%s8 + $0x78] sm:$0xff]
    %v1666 = vld [vmem:[%s8 + $0x80] sm:$0xff]
    %v1667 = vld [vmem:[%s8 + $0x88] sm:$0xff]
    %v1668 = vld [vmem:[%s8 + $0x90] sm:$0xff]
    %v1669 = vld [vmem:[%s8 + $0x98] sm:$0xff]
    %v1670 = vld [vmem:[%s8 + $0xa0] sm:$0xff]
    %v1671 = vld [vmem:[%s8 + $0xa8] sm:$0xff]
    %v1672 = vld [vmem:[%s8 + $0xb0] sm:$0xff]
    %v1673 = vld [vmem:[%s8 + $0xb8] sm:$0xff]
    %v1674 = vld [vmem:[%s8 + $0xc0] sm:$0xff]
    %v1675 = vld [vmem:[%s8 + $0xc8] sm:$0xff]
    %v1676 = vld [vmem:[%s8 + $0xd0] sm:$0xff]
    %v1677 = vld [vmem:[%s8 + $0xd8] sm:$0xff]
    %v1678 = vld [vmem:[%s8 + $0xe0] sm:$0xff]
    %v1679 = vld [vmem:[%s8 + $0xe8] sm:$0xff]
    %v1680 = vld [vmem:[%s8 + $0xf0] sm:$0xff]
    %v1681 = vld [vmem:[%s8 + $0xf8] sm:$0xff]
    %v1682 = vld [vmem:[%s8 + $0x100] sm:$0xff]
    %v1683 = vld [vmem:[%s8 + $0x108] sm:$0xff]
    %v1684 = vld [vmem:[%s8 + $0x110] sm:$0xff]
    %v1685 = vld [vmem:[%s8 + $0x118] sm:$0xff]
    %v1686 = vld [vmem:[%s8 + $0x120] sm:$0xff]
    %v1687 = vld [vmem:[%s8 + $0x128] sm:$0xff]
    %v1688 = vld [vmem:[%s8 + $0x130] sm:$0xff]
    %v1689 = vld [vmem:[%s8 + $0x138] sm:$0xff]
    %v1690 = vld [vmem:[%s8 + $0x140] sm:$0xff]
    %v1691 = vld [vmem:[%s8 + $0x148] sm:$0xff]
    %v1692 = vld [vmem:[%s8 + $0x150] sm:$0xff]
    %v1693 = vld [vmem:[%s8 + $0x158] sm:$0xff]
    %v1694 = vld [vmem:[%s8 + $0x160] sm:$0xff]
    %v1695 = vld [vmem:[%s8 + $0x168] sm:$0xff]
    %v1696 = vld [vmem:[%s8 + $0x170] sm:$0xff]
    %v1697 = vld [vmem:[%s8 + $0x178] sm:$0xff]
    %v1698 = vld [vmem:[%s8 + $0x180] sm:$0xff]
    %v1699 = vld [vmem:[%s8 + $0x188] sm:$0xff]
    %v1700 = vld [vmem:[%s8 + $0x190] sm:$0xff]
    %v1701 = vld [vmem:[%s8 + $0x198] sm:$0xff]
    %v1702 = vld [vmem:[%s8 + $0x1a0] sm:$0xff]
    %v1703 = vld [vmem:[%s8 + $0x1a8] sm:$0xff]
    %v1704 = vld [vmem:[%s8 + $0x1b0] sm:$0xff]
    %v1705 = vld [vmem:[%s8 + $0x1b8] sm:$0xff]
    %v1706 = vld [vmem:[%s8 + $0x1c0] sm:$0xff]
    %v1707 = vld [vmem:[%s8 + $0x1c8] sm:$0xff]
    %v1708 = vld [vmem:[%s8 + $0x1d0] sm:$0xff]
    %v1709 = vld [vmem:[%s8 + $0x1d8] sm:$0xff]
    %v1710 = vld [vmem:[%s8 + $0x1e0] sm:$0xff]
    %v1711 = vld [vmem:[%s8 + $0x1e8] sm:$0xff]
    %v1712 = vld [vmem:[%s8 + $0x1f0] sm:$0xff]
    %v1713 = vld [vmem:[%s8 + $0x1f8] sm:$0xff]
    %v1714 = vld [vmem:[%s8 + $0x200] sm:$0xff]
    %v1715 = vld [vmem:[%s8 + $0x208] sm:$0xff]
    %v1716 = vld [vmem:[%s8 + $0x210] sm:$0xff]
    %v1717 = vld [vmem:[%s8 + $0x218] sm:$0xff]
    %v1718 = vld [vmem:[%s8 + $0x220] sm:$0xff]
    %v1719 = vld [vmem:[%s8 + $0x228] sm:$0xff]
    %v1720 = vld [vmem:[%s8 + $0x230] sm:$0xff]
    %v1721 = vld [vmem:[%s8 + $0x238] sm:$0xff]
    %v1722 = vld [vmem:[%s8 + $0x240] sm:$0xff]
    %v1723 = vld [vmem:[%s8 + $0x248] sm:$0xff]
    %v1724 = vld [vmem:[%s8 + $0x250] sm:$0xff]
    %v1725 = vld [vmem:[%s8 + $0x258] sm:$0xff]
    %v1726 = vld [vmem:[%s8 + $0x260] sm:$0xff]
    %v1727 = vld [vmem:[%s8 + $0x268] sm:$0xff]
    %v1728 = vld [vmem:[%s8 + $0x270] sm:$0xff]
    %v1729 = vld [vmem:[%s8 + $0x278] sm:$0xff]
    %s1730 = scalar_lea.vmem [#allocation3], 2
    %v1731 = vld [vmem:[%s1730] ss:$4 sm:$0xff]
    %s1732 = scalar_lea.vmem [#allocation3], 3
    %v1733 = vld [vmem:[%s1732] ss:$4 sm:$0xff]
    %v1734 = vmax.f32 %v1731, %v1733
    %v1735 = vld [vmem:[%s8 + $0x280] sm:$0xff]
    %v1736 = vld [vmem:[%s8 + $0x288] sm:$0xff]
    %v1737 = vld [vmem:[%s8 + $0x290] sm:$0xff]
    %v1738 = vld [vmem:[%s8 + $0x298] sm:$0xff]
    %v1739 = vld [vmem:[%s8 + $0x2a0] sm:$0xff]
    %v1740 = vld [vmem:[%s8 + $0x2a8] sm:$0xff]
    %v1741 = vld [vmem:[%s8 + $0x2b0] sm:$0xff]
    %v1742 = vld [vmem:[%s8 + $0x2b8] sm:$0xff]
    %v1743 = vld [vmem:[%s8 + $0x2c0] sm:$0xff]
    %v1744 = vld [vmem:[%s8 + $0x2c8] sm:$0xff]
    %v1745 = vld [vmem:[%s8 + $0x2d0] sm:$0xff]
    %v1746 = vld [vmem:[%s8 + $0x2d8] sm:$0xff]
    %v1747 = vld [vmem:[%s8 + $0x2e0] sm:$0xff]
    %v1748 = vld [vmem:[%s8 + $0x2e8] sm:$0xff]
    %v1749 = vld [vmem:[%s8 + $0x2f0] sm:$0xff]
    %v1750 = vld [vmem:[%s8 + $0x2f8] sm:$0xff]
    %v1751 = vld [vmem:[%s8 + $0x300] sm:$0xff]
    %v1752 = vld [vmem:[%s8 + $0x308] sm:$0xff]
    %v1753 = vld [vmem:[%s8 + $0x310] sm:$0xff]
    %v1754 = vld [vmem:[%s8 + $0x318] sm:$0xff]
    %v1755 = vld [vmem:[%s8 + $0x320] sm:$0xff]
    %v1756 = vld [vmem:[%s8 + $0x328] sm:$0xff]
    %v1757 = vld [vmem:[%s8 + $0x330] sm:$0xff]
    %v1758 = vld [vmem:[%s8 + $0x338] sm:$0xff]
    %v1759 = vld [vmem:[%s8 + $0x340] sm:$0xff]
    %v1760 = vld [vmem:[%s8 + $0x348] sm:$0xff]
    %v1761 = vld [vmem:[%s8 + $0x350] sm:$0xff]
    %v1762 = vld [vmem:[%s8 + $0x358] sm:$0xff]
    %v1763 = vld [vmem:[%s8 + $0x360] sm:$0xff]
    %v1764 = vld [vmem:[%s8 + $0x368] sm:$0xff]
    %v1765 = vld [vmem:[%s8 + $0x370] sm:$0xff]
    %v1766 = vld [vmem:[%s8 + $0x378] sm:$0xff]
    %v1767 = vld [vmem:[%s8 + $0x380] sm:$0xff]
    %v1768 = vld [vmem:[%s8 + $0x388] sm:$0xff]
    %v1769 = vld [vmem:[%s8 + $0x390] sm:$0xff]
    %v1770 = vld [vmem:[%s8 + $0x398] sm:$0xff]
    %v1771 = vld [vmem:[%s8 + $0x3a0] sm:$0xff]
    %v1772 = vld [vmem:[%s8 + $0x3a8] sm:$0xff]
    %v1773 = vld [vmem:[%s8 + $0x3b0] sm:$0xff]
    %v1774 = vld [vmem:[%s8 + $0x3b8] sm:$0xff]
    %v1775 = vld [vmem:[%s8 + $0x3c0] sm:$0xff]
    %v1776 = vld [vmem:[%s8 + $0x3c8] sm:$0xff]
    %v1777 = vld [vmem:[%s8 + $0x3d0] sm:$0xff]
    %v1778 = vld [vmem:[%s8 + $0x3d8] sm:$0xff]
    %v1779 = vld [vmem:[%s8 + $0x3e0] sm:$0xff]
    %v1780 = vld [vmem:[%s8 + $0x3e8] sm:$0xff]
    %v1781 = vld [vmem:[%s8 + $0x3f0] sm:$0xff]
    %v1782 = vld [vmem:[%s8 + $0x3f8] sm:$0xff]
    %v1783 = vld [vmem:[%s8 + $0x400] sm:$0xff]
    %v1784 = vld [vmem:[%s8 + $0x408] sm:$0xff]
    %v1785 = vld [vmem:[%s8 + $0x410] sm:$0xff]
    %v1786 = vld [vmem:[%s8 + $0x418] sm:$0xff]
    %v1787 = vld [vmem:[%s8 + $0x420] sm:$0xff]
    %v1788 = vld [vmem:[%s8 + $0x428] sm:$0xff]
    %v1789 = vld [vmem:[%s8 + $0x430] sm:$0xff]
    %v1790 = vld [vmem:[%s8 + $0x438] sm:$0xff]
    %v1791 = vld [vmem:[%s8 + $0x440] sm:$0xff]
    %v1792 = vld [vmem:[%s8 + $0x448] sm:$0xff]
    %v1793 = vld [vmem:[%s8 + $0x450] sm:$0xff]
    %v1794 = vld [vmem:[%s8 + $0x458] sm:$0xff]
    %v1795 = vld [vmem:[%s8 + $0x460] sm:$0xff]
    %v1796 = vld [vmem:[%s8 + $0x468] sm:$0xff]
    %v1797 = vld [vmem:[%s8 + $0x470] sm:$0xff]
    %v1798 = vld [vmem:[%s8 + $0x478] sm:$0xff]
    %v1799 = vld [vmem:[%s8 + $0x480] sm:$0xff]
    %v1800 = vld [vmem:[%s8 + $0x488] sm:$0xff]
    %v1801 = vld [vmem:[%s8 + $0x490] sm:$0xff]
    %v1802 = vld [vmem:[%s8 + $0x498] sm:$0xff]
    %v1803 = vld [vmem:[%s8 + $0x4a0] sm:$0xff]
    %v1804 = vld [vmem:[%s8 + $0x4a8] sm:$0xff]
    %v1805 = vld [vmem:[%s8 + $0x4b0] sm:$0xff]
    %v1806 = vld [vmem:[%s8 + $0x4b8] sm:$0xff]
    %v1807 = vld [vmem:[%s8 + $0x4c0] sm:$0xff]
    %v1808 = vld [vmem:[%s8 + $0x4c8] sm:$0xff]
    %v1809 = vld [vmem:[%s8 + $0x4d0] sm:$0xff]
    %v1810 = vld [vmem:[%s8 + $0x4d8] sm:$0xff]
    %v1811 = vld [vmem:[%s8 + $0x4e0] sm:$0xff]
    %v1812 = vld [vmem:[%s8 + $0x4e8] sm:$0xff]
    %v1813 = vld [vmem:[%s8 + $0x4f0] sm:$0xff]
    %v1814 = vld [vmem:[%s8 + $0x4f8] sm:$0xff]
    %1815 = vmatprep.subr.mxu0 %v1736
    %1816 = vmatpush1.msra.mxu0 %v1735
    %1817 = vmatprep.subr.mxu0 %v1741
    %1818 = vmatpush1.msra.mxu0 %v1740
    %1819 = vmatprep.subr.mxu0 %v1746
    %1820 = vmatpush1.msra.mxu0 %v1745
    %1821 = vmatprep.subr.mxu0 %v1751
    %1822 = vmatpush1.msra.mxu0 %v1750
    %1823 = vmatprep.subr.mxu0 %v1756
    %1824 = vmatpush1.msra.mxu0 %v1755
    %1825 = vmatprep.subr.mxu0 %v1761
    %1826 = vmatpush1.msra.mxu0 %v1760
    %1827 = vmatprep.subr.mxu0 %v1766
    %1828 = vmatpush1.msra.mxu0 %v1765
    %1829 = vmatprep.subr.mxu0 %v1771
    %1830 = vmatpush1.msra.mxu0 %v1770
    %1831 = vmatprep.subr.mxu0 %v1776
    %1832 = vmatpush1.msra.mxu0 %v1775
    %1833 = vmatprep.subr.mxu0 %v1781
    %1834 = vmatpush1.msra.mxu0 %v1780
    %1835 = vmatprep.subr.mxu0 %v1786
    %1836 = vmatpush1.msra.mxu0 %v1785
    %1837 = vmatprep.subr.mxu0 %v1791
    %1838 = vmatpush1.msra.mxu0 %v1790
    %1839 = vmatprep.subr.mxu0 %v1796
    %1840 = vmatpush1.msra.mxu0 %v1795
    %1841 = vmatprep.subr.mxu0 %v1801
    %1842 = vmatpush1.msra.mxu0 %v1800
    %1843 = vmatprep.subr.mxu0 %v1806
    %1844 = vmatpush1.msra.mxu0 %v1805
    %1845 = vmatprep.subr.mxu0 %v1811
    %1846 = vmatpush1.msra.mxu0 %v1810
    %1847 = vmatprep.subr.mxu0 0.0
    %1848 = vmatpush1.msra.mxu0 0.0
    %1849 = vmatprep.subr.mxu0 0.0
    %1850 = vmatpush1.msra.mxu0 0.0
    %1851 = vmatprep.subr.mxu0 0.0
    %1852 = vmatpush1.msra.mxu0 0.0
    %1853 = vmatprep.subr.mxu0 0.0
    %1854 = vmatpush1.msra.mxu0 0.0
    %1855 = vmatprep.subr.mxu0 0.0
    %1856 = vmatpush1.msra.mxu0 0.0
    %1857 = vmatprep.subr.mxu0 0.0
    %1858 = vmatpush1.msra.mxu0 0.0
    %1859 = vmatprep.subr.mxu0 0.0
    %1860 = vmatpush1.msra.mxu0 0.0
    %1861 = vmatprep.subr.mxu0 0.0
    %1862 = vmatpush1.msra.mxu0 0.0
    %1863 = vmatprep.subr.mxu0 0.0
    %1864 = vmatpush1.msra.mxu0 0.0
    %1865 = vmatprep.subr.mxu0 0.0
    %1866 = vmatpush1.msra.mxu0 0.0
    %1867 = vmatprep.subr.mxu0 0.0
    %1868 = vmatpush1.msra.mxu0 0.0
    %1869 = vmatprep.subr.mxu0 0.0
    %1870 = vmatpush1.msra.mxu0 0.0
    %1871 = vmatprep.subr.mxu0 0.0
    %1872 = vmatpush1.msra.mxu0 0.0
    %1873 = vmatprep.subr.mxu0 0.0
    %1874 = vmatpush1.msra.mxu0 0.0
    %1875 = vmatprep.subr.mxu0 0.0
    %1876 = vmatpush1.msra.mxu0 0.0
    %1877 = vmatprep.subr.mxu0 0.0
    %1878 = vmatpush1.msra.mxu0 0.0
    %1879 = vmatprep.mubr.f32.mxu0 0.0
    %1880 = vmatmul.mubr.f32.gmra.mrb[0].mxu0 %v1734
    %v1881 = vpop.f32.mrb[0].mxu0
    %v1882 = vadd.f32 0.0, %v1881
    %v1883 = vpop.f32.mrb[0].mxu0
    %v1884 = vadd.f32 0.0, %v1883
    %1885 = vdwg.mxu0
    %1886 = vmatprep.subr.mxu0 %v1738
    %1887 = vmatpush1.msra.mxu0 %v1737
    %1888 = vmatprep.subr.mxu0 %v1743
    %1889 = vmatpush1.msra.mxu0 %v1742
    %1890 = vmatprep.subr.mxu0 %v1748
    %1891 = vmatpush1.msra.mxu0 %v1747
    %1892 = vmatprep.subr.mxu0 %v1753
    %1893 = vmatpush1.msra.mxu0 %v1752
    %1894 = vmatprep.subr.mxu0 %v1758
    %1895 = vmatpush1.msra.mxu0 %v1757
    %1896 = vmatprep.subr.mxu0 %v1763
    %1897 = vmatpush1.msra.mxu0 %v1762
    %1898 = vmatprep.subr.mxu0 %v1768
    %1899 = vmatpush1.msra.mxu0 %v1767
    %1900 = vmatprep.subr.mxu0 %v1773
    %1901 = vmatpush1.msra.mxu0 %v1772
    %1902 = vmatprep.subr.mxu0 %v1778
    %1903 = vmatpush1.msra.mxu0 %v1777
    %1904 = vmatprep.subr.mxu0 %v1783
    %1905 = vmatpush1.msra.mxu0 %v1782
    %1906 = vmatprep.subr.mxu0 %v1788
    %1907 = vmatpush1.msra.mxu0 %v1787
    %1908 = vmatprep.subr.mxu0 %v1793
    %1909 = vmatpush1.msra.mxu0 %v1792
    %1910 = vmatprep.subr.mxu0 %v1798
    %1911 = vmatpush1.msra.mxu0 %v1797
    %1912 = vmatprep.subr.mxu0 %v1803
    %1913 = vmatpush1.msra.mxu0 %v1802
    %1914 = vmatprep.subr.mxu0 %v1808
    %1915 = vmatpush1.msra.mxu0 %v1807
    %1916 = vmatprep.subr.mxu0 %v1813
    %1917 = vmatpush1.msra.mxu0 %v1812
    %1918 = vmatprep.subr.mxu0 0.0
    %1919 = vmatpush1.msra.mxu0 0.0
    %1920 = vmatprep.subr.mxu0 0.0
    %1921 = vmatpush1.msra.mxu0 0.0
    %1922 = vmatprep.subr.mxu0 0.0
    %1923 = vmatpush1.msra.mxu0 0.0
    %1924 = vmatprep.subr.mxu0 0.0
    %1925 = vmatpush1.msra.mxu0 0.0
    %1926 = vmatprep.subr.mxu0 0.0
    %1927 = vmatpush1.msra.mxu0 0.0
    %1928 = vmatprep.subr.mxu0 0.0
    %1929 = vmatpush1.msra.mxu0 0.0
    %1930 = vmatprep.subr.mxu0 0.0
    %1931 = vmatpush1.msra.mxu0 0.0
    %1932 = vmatprep.subr.mxu0 0.0
    %1933 = vmatpush1.msra.mxu0 0.0
    %1934 = vmatprep.subr.mxu0 0.0
    %1935 = vmatpush1.msra.mxu0 0.0
    %1936 = vmatprep.subr.mxu0 0.0
    %1937 = vmatpush1.msra.mxu0 0.0
    %1938 = vmatprep.subr.mxu0 0.0
    %1939 = vmatpush1.msra.mxu0 0.0
    %1940 = vmatprep.subr.mxu0 0.0
    %1941 = vmatpush1.msra.mxu0 0.0
    %1942 = vmatprep.subr.mxu0 0.0
    %1943 = vmatpush1.msra.mxu0 0.0
    %1944 = vmatprep.subr.mxu0 0.0
    %1945 = vmatpush1.msra.mxu0 0.0
    %1946 = vmatprep.subr.mxu0 0.0
    %1947 = vmatpush1.msra.mxu0 0.0
    %1948 = vmatprep.subr.mxu0 0.0
    %1949 = vmatpush1.msra.mxu0 0.0
    %1950 = vmatprep.mubr.f32.mxu0 0.0
    %1951 = vmatmul.mubr.f32.gmra.mrb[0].mxu0 %v1734
    %v1952 = vpop.f32.mrb[0].mxu0
    %v1953 = vadd.f32 0.0, %v1952
    %v1954 = vpop.f32.mrb[0].mxu0
    %v1955 = vadd.f32 0.0, %v1954
    %1956 = vdwg.mxu0
    %1957 = vmatprep.subr.mxu0 0.0
    %1958 = vmatpush1.msra.mxu0 %v1739
    %1959 = vmatprep.subr.mxu0 0.0
    %1960 = vmatpush1.msra.mxu0 %v1744
    %1961 = vmatprep.subr.mxu0 0.0
    %1962 = vmatpush1.msra.mxu0 %v1749
    %1963 = vmatprep.subr.mxu0 0.0
    %1964 = vmatpush1.msra.mxu0 %v1754
    %1965 = vmatprep.subr.mxu0 0.0
    %1966 = vmatpush1.msra.mxu0 %v1759
    %1967 = vmatprep.subr.mxu0 0.0
    %1968 = vmatpush1.msra.mxu0 %v1764
    %1969 = vmatprep.subr.mxu0 0.0
    %1970 = vmatpush1.msra.mxu0 %v1769
    %1971 = vmatprep.subr.mxu0 0.0
    %1972 = vmatpush1.msra.mxu0 %v1774
    %1973 = vmatprep.subr.mxu0 0.0
    %1974 = vmatpush1.msra.mxu0 %v1779
    %1975 = vmatprep.subr.mxu0 0.0
    %1976 = vmatpush1.msra.mxu0 %v1784
    %1977 = vmatprep.subr.mxu0 0.0
    %1978 = vmatpush1.msra.mxu0 %v1789
    %1979 = vmatprep.subr.mxu0 0.0
    %1980 = vmatpush1.msra.mxu0 %v1794
    %1981 = vmatprep.subr.mxu0 0.0
    %1982 = vmatpush1.msra.mxu0 %v1799
    %1983 = vmatprep.subr.mxu0 0.0
    %1984 = vmatpush1.msra.mxu0 %v1804
    %1985 = vmatprep.subr.mxu0 0.0
    %1986 = vmatpush1.msra.mxu0 %v1809
    %1987 = vmatprep.subr.mxu0 0.0
    %1988 = vmatpush1.msra.mxu0 %v1814
    %1989 = vmatprep.subr.mxu0 0.0
    %1990 = vmatpush1.msra.mxu0 0.0
    %1991 = vmatprep.subr.mxu0 0.0
    %1992 = vmatpush1.msra.mxu0 0.0
    %1993 = vmatprep.subr.mxu0 0.0
    %1994 = vmatpush1.msra.mxu0 0.0
    %1995 = vmatprep.subr.mxu0 0.0
    %1996 = vmatpush1.msra.mxu0 0.0
    %1997 = vmatprep.subr.mxu0 0.0
    %1998 = vmatpush1.msra.mxu0 0.0
    %1999 = vmatprep.subr.mxu0 0.0
    %2000 = vmatpush1.msra.mxu0 0.0
    %2001 = vmatprep.subr.mxu0 0.0
    %2002 = vmatpush1.msra.mxu0 0.0
    %2003 = vmatprep.subr.mxu0 0.0
    %2004 = vmatpush1.msra.mxu0 0.0
    %2005 = vmatprep.subr.mxu0 0.0
    %2006 = vmatpush1.msra.mxu0 0.0
    %2007 = vmatprep.subr.mxu0 0.0
    %2008 = vmatpush1.msra.mxu0 0.0
    %2009 = vmatprep.subr.mxu0 0.0
    %2010 = vmatpush1.msra.mxu0 0.0
    %2011 = vmatprep.subr.mxu0 0.0
    %2012 = vmatpush1.msra.mxu0 0.0
    %2013 = vmatprep.subr.mxu0 0.0
    %2014 = vmatpush1.msra.mxu0 0.0
    %2015 = vmatprep.subr.mxu0 0.0
    %2016 = vmatpush1.msra.mxu0 0.0
    %2017 = vmatprep.subr.mxu0 0.0
    %2018 = vmatpush1.msra.mxu0 0.0
    %2019 = vmatprep.subr.mxu0 0.0
    %2020 = vmatpush1.msra.mxu0 0.0
    %2021 = vmatprep.mubr.f32.mxu0 0.0
    %2022 = vmatmul.mubr.f32.gmra.mrb[0].mxu0 %v1734
    %v2023 = vpop.f32.mrb[0].mxu0
    %v2024 = vadd.f32 0.0, %v2023
    %v2025 = vpop.f32.mrb[0].mxu0
    %2026 = vdwg.mxu0
    %2027 = vmatprep.subr.mxu0 %v1651
    %2028 = vmatpush1.msra.mxu0 %v1650
    %2029 = vmatprep.subr.mxu0 %v1656
    %2030 = vmatpush1.msra.mxu0 %v1655
    %2031 = vmatprep.subr.mxu0 %v1661
    %2032 = vmatpush1.msra.mxu0 %v1660
    %2033 = vmatprep.subr.mxu0 %v1666
    %2034 = vmatpush1.msra.mxu0 %v1665
    %2035 = vmatprep.subr.mxu0 %v1671
    %2036 = vmatpush1.msra.mxu0 %v1670
    %2037 = vmatprep.subr.mxu0 %v1676
    %2038 = vmatpush1.msra.mxu0 %v1675
    %2039 = vmatprep.subr.mxu0 %v1681
    %2040 = vmatpush1.msra.mxu0 %v1680
    %2041 = vmatprep.subr.mxu0 %v1686
    %2042 = vmatpush1.msra.mxu0 %v1685
    %2043 = vmatprep.subr.mxu0 %v1691
    %2044 = vmatpush1.msra.mxu0 %v1690
    %2045 = vmatprep.subr.mxu0 %v1696
    %2046 = vmatpush1.msra.mxu0 %v1695
    %2047 = vmatprep.subr.mxu0 %v1701
    %2048 = vmatpush1.msra.mxu0 %v1700
    %2049 = vmatprep.subr.mxu0 %v1706
    %2050 = vmatpush1.msra.mxu0 %v1705
    %2051 = vmatprep.subr.mxu0 %v1711
    %2052 = vmatpush1.msra.mxu0 %v1710
    %2053 = vmatprep.subr.mxu0 %v1716
    %2054 = vmatpush1.msra.mxu0 %v1715
    %2055 = vmatprep.subr.mxu0 %v1721
    %2056 = vmatpush1.msra.mxu0 %v1720
    %2057 = vmatprep.subr.mxu0 %v1726
    %2058 = vmatpush1.msra.mxu0 %v1725
    %2059 = vmatprep.subr.mxu0 0.0
    %2060 = vmatpush1.msra.mxu0 0.0
    %2061 = vmatprep.subr.mxu0 0.0
    %2062 = vmatpush1.msra.mxu0 0.0
    %2063 = vmatprep.subr.mxu0 0.0
    %2064 = vmatpush1.msra.mxu0 0.0
    %2065 = vmatprep.subr.mxu0 0.0
    %2066 = vmatpush1.msra.mxu0 0.0
    %2067 = vmatprep.subr.mxu0 0.0
    %2068 = vmatpush1.msra.mxu0 0.0
    %2069 = vmatprep.subr.mxu0 0.0
    %2070 = vmatpush1.msra.mxu0 0.0
    %2071 = vmatprep.subr.mxu0 0.0
    %2072 = vmatpush1.msra.mxu0 0.0
    %2073 = vmatprep.subr.mxu0 0.0
    %2074 = vmatpush1.msra.mxu0 0.0
    %2075 = vmatprep.subr.mxu0 0.0
    %2076 = vmatpush1.msra.mxu0 0.0
    %2077 = vmatprep.subr.mxu0 0.0
    %2078 = vmatpush1.msra.mxu0 0.0
    %2079 = vmatprep.subr.mxu0 0.0
    %2080 = vmatpush1.msra.mxu0 0.0
    %2081 = vmatprep.subr.mxu0 0.0
    %2082 = vmatpush1.msra.mxu0 0.0
    %2083 = vmatprep.subr.mxu0 0.0
    %2084 = vmatpush1.msra.mxu0 0.0
    %2085 = vmatprep.subr.mxu0 0.0
    %2086 = vmatpush1.msra.mxu0 0.0
    %2087 = vmatprep.subr.mxu0 0.0
    %2088 = vmatpush1.msra.mxu0 0.0
    %2089 = vmatprep.subr.mxu0 0.0
    %2090 = vmatpush1.msra.mxu0 0.0
    %2091 = vmatprep.mubr.f32.mxu0 0.0
    %2092 = vmatmul.mubr.f32.gmra.mrb[0].mxu0 %v1649
    %v2093 = vpop.f32.mrb[0].mxu0
    %v2094 = vadd.f32 %v1882, %v2093
    %v2095 = vpop.f32.mrb[0].mxu0
    %v2096 = vadd.f32 %v1884, %v2095
    %2097 = vdwg.mxu0
    %2098 = vmatprep.subr.mxu0 %v1653
    %2099 = vmatpush1.msra.mxu0 %v1652
    %2100 = vmatprep.subr.mxu0 %v1658
    %2101 = vmatpush1.msra.mxu0 %v1657
    %2102 = vmatprep.subr.mxu0 %v1663
    %2103 = vmatpush1.msra.mxu0 %v1662
    %2104 = vmatprep.subr.mxu0 %v1668
    %2105 = vmatpush1.msra.mxu0 %v1667
    %2106 = vmatprep.subr.mxu0 %v1673
    %2107 = vmatpush1.msra.mxu0 %v1672
    %2108 = vmatprep.subr.mxu0 %v1678
    %2109 = vmatpush1.msra.mxu0 %v1677
    %2110 = vmatprep.subr.mxu0 %v1683
    %2111 = vmatpush1.msra.mxu0 %v1682
    %2112 = vmatprep.subr.mxu0 %v1688
    %2113 = vmatpush1.msra.mxu0 %v1687
    %2114 = vmatprep.subr.mxu0 %v1693
    %2115 = vmatpush1.msra.mxu0 %v1692
    %2116 = vmatprep.subr.mxu0 %v1698
    %2117 = vmatpush1.msra.mxu0 %v1697
    %2118 = vmatprep.subr.mxu0 %v1703
    %2119 = vmatpush1.msra.mxu0 %v1702
    %2120 = vmatprep.subr.mxu0 %v1708
    %2121 = vmatpush1.msra.mxu0 %v1707
    %2122 = vmatprep.subr.mxu0 %v1713
    %2123 = vmatpush1.msra.mxu0 %v1712
    %2124 = vmatprep.subr.mxu0 %v1718
    %2125 = vmatpush1.msra.mxu0 %v1717
    %2126 = vmatprep.subr.mxu0 %v1723
    %2127 = vmatpush1.msra.mxu0 %v1722
    %2128 = vmatprep.subr.mxu0 %v1728
    %2129 = vmatpush1.msra.mxu0 %v1727
    %2130 = vmatprep.subr.mxu0 0.0
    %2131 = vmatpush1.msra.mxu0 0.0
    %2132 = vmatprep.subr.mxu0 0.0
    %2133 = vmatpush1.msra.mxu0 0.0
    %2134 = vmatprep.subr.mxu0 0.0
    %2135 = vmatpush1.msra.mxu0 0.0
    %2136 = vmatprep.subr.mxu0 0.0
    %2137 = vmatpush1.msra.mxu0 0.0
    %2138 = vmatprep.subr.mxu0 0.0
    %2139 = vmatpush1.msra.mxu0 0.0
    %2140 = vmatprep.subr.mxu0 0.0
    %2141 = vmatpush1.msra.mxu0 0.0
    %2142 = vmatprep.subr.mxu0 0.0
    %2143 = vmatpush1.msra.mxu0 0.0
    %2144 = vmatprep.subr.mxu0 0.0
    %2145 = vmatpush1.msra.mxu0 0.0
    %2146 = vmatprep.subr.mxu0 0.0
    %2147 = vmatpush1.msra.mxu0 0.0
    %2148 = vmatprep.subr.mxu0 0.0
    %2149 = vmatpush1.msra.mxu0 0.0
    %2150 = vmatprep.subr.mxu0 0.0
    %2151 = vmatpush1.msra.mxu0 0.0
    %2152 = vmatprep.subr.mxu0 0.0
    %2153 = vmatpush1.msra.mxu0 0.0
    %2154 = vmatprep.subr.mxu0 0.0
    %2155 = vmatpush1.msra.mxu0 0.0
    %2156 = vmatprep.subr.mxu0 0.0
    %2157 = vmatpush1.msra.mxu0 0.0
    %2158 = vmatprep.subr.mxu0 0.0
    %2159 = vmatpush1.msra.mxu0 0.0
    %2160 = vmatprep.subr.mxu0 0.0
    %2161 = vmatpush1.msra.mxu0 0.0
    %2162 = vmatprep.mubr.f32.mxu0 0.0
    %2163 = vmatmul.mubr.f32.gmra.mrb[0].mxu0 %v1649
    %v2164 = vpop.f32.mrb[0].mxu0
    %v2165 = vadd.f32 %v1953, %v2164
    %v2166 = vpop.f32.mrb[0].mxu0
    %v2167 = vadd.f32 %v1955, %v2166
    %2168 = vdwg.mxu0
    %2169 = vmatprep.subr.mxu0 0.0
    %2170 = vmatpush1.msra.mxu0 %v1654
    %2171 = vmatprep.subr.mxu0 0.0
    %2172 = vmatpush1.msra.mxu0 %v1659
    %2173 = vmatprep.subr.mxu0 0.0
    %2174 = vmatpush1.msra.mxu0 %v1664
    %2175 = vmatprep.subr.mxu0 0.0
    %2176 = vmatpush1.msra.mxu0 %v1669
    %2177 = vmatprep.subr.mxu0 0.0
    %2178 = vmatpush1.msra.mxu0 %v1674
    %2179 = vmatprep.subr.mxu0 0.0
    %2180 = vmatpush1.msra.mxu0 %v1679
    %2181 = vmatprep.subr.mxu0 0.0
    %2182 = vmatpush1.msra.mxu0 %v1684
    %2183 = vmatprep.subr.mxu0 0.0
    %2184 = vmatpush1.msra.mxu0 %v1689
    %2185 = vmatprep.subr.mxu0 0.0
    %2186 = vmatpush1.msra.mxu0 %v1694
    %2187 = vmatprep.subr.mxu0 0.0
    %2188 = vmatpush1.msra.mxu0 %v1699
    %2189 = vmatprep.subr.mxu0 0.0
    %2190 = vmatpush1.msra.mxu0 %v1704
    %2191 = vmatprep.subr.mxu0 0.0
    %2192 = vmatpush1.msra.mxu0 %v1709
    %2193 = vmatprep.subr.mxu0 0.0
    %2194 = vmatpush1.msra.mxu0 %v1714
    %2195 = vmatprep.subr.mxu0 0.0
    %2196 = vmatpush1.msra.mxu0 %v1719
    %2197 = vmatprep.subr.mxu0 0.0
    %2198 = vmatpush1.msra.mxu0 %v1724
    %2199 = vmatprep.subr.mxu0 0.0
    %2200 = vmatpush1.msra.mxu0 %v1729
    %2201 = vmatprep.subr.mxu0 0.0
    %2202 = vmatpush1.msra.mxu0 0.0
    %2203 = vmatprep.subr.mxu0 0.0
    %2204 = vmatpush1.msra.mxu0 0.0
    %2205 = vmatprep.subr.mxu0 0.0
    %2206 = vmatpush1.msra.mxu0 0.0
    %2207 = vmatprep.subr.mxu0 0.0
    %2208 = vmatpush1.msra.mxu0 0.0
    %2209 = vmatprep.subr.mxu0 0.0
    %2210 = vmatpush1.msra.mxu0 0.0
    %2211 = vmatprep.subr.mxu0 0.0
    %2212 = vmatpush1.msra.mxu0 0.0
    %2213 = vmatprep.subr.mxu0 0.0
    %2214 = vmatpush1.msra.mxu0 0.0
    %2215 = vmatprep.subr.mxu0 0.0
    %2216 = vmatpush1.msra.mxu0 0.0
    %2217 = vmatprep.subr.mxu0 0.0
    %2218 = vmatpush1.msra.mxu0 0.0
    %2219 = vmatprep.subr.mxu0 0.0
    %2220 = vmatpush1.msra.mxu0 0.0
    %2221 = vmatprep.subr.mxu0 0.0
    %2222 = vmatpush1.msra.mxu0 0.0
    %2223 = vmatprep.subr.mxu0 0.0
    %2224 = vmatpush1.msra.mxu0 0.0
    %2225 = vmatprep.subr.mxu0 0.0
    %2226 = vmatpush1.msra.mxu0 0.0
    %2227 = vmatprep.subr.mxu0 0.0
    %2228 = vmatpush1.msra.mxu0 0.0
    %2229 = vmatprep.subr.mxu0 0.0
    %2230 = vmatpush1.msra.mxu0 0.0
    %2231 = vmatprep.subr.mxu0 0.0
    %2232 = vmatpush1.msra.mxu0 0.0
    %2233 = vmatprep.mubr.f32.mxu0 0.0
    %2234 = vmatmul.mubr.f32.gmra.mrb[0].mxu0 %v1649
    %v2235 = vpop.f32.mrb[0].mxu0
    %v2236 = vadd.f32 %v2024, %v2235
    %v2237 = vpop.f32.mrb[0].mxu0
    %2238 = vdwg.mxu0
    %v2239 = vld [vmem:[%s9] sm:$0x1f]
    %v2241 = vlaneseq
    %v2242 = vshrl.u32 %v2241, 7
    %v2243 = vsub.s32 0, %v2242
    %v2244 = vrot.slane %v2239, %v2243
    %v2245 = vlaneseq
    %v2246 = vshrl.u32 %v2245, 7
    %v2247 = vsub.s32 1, %v2246
    %v2248 = vrot.slane %v2239, %v2247
    %v2249 = vlaneseq
    %v2250 = vshrl.u32 %v2249, 7
    %v2251 = vsub.s32 2, %v2250
    %v2252 = vrot.slane %v2239, %v2251
    %v2253 = vlaneseq
    %v2254 = vshrl.u32 %v2253, 7
    %v2255 = vsub.s32 3, %v2254
    %v2256 = vrot.slane %v2239, %v2255
    %v2257 = vlaneseq
    %v2258 = vshrl.u32 %v2257, 7
    %v2259 = vsub.s32 4, %v2258
    %v2260 = vrot.slane %v2239, %v2259
    %v2266 = vadd.f32 %v2094, %v2244
    %v2267 = vadd.f32 %v2096, %v2248
    %v2268 = vadd.f32 %v2165, %v2252
    %v2269 = vadd.f32 %v2167, %v2256
    %v2270 = vadd.f32 %v2236, %v2260
    %v2271 = vmax.f32 %v2266, 0.0
    %v2272 = vmax.f32 %v2267, 0.0
    %v2273 = vmax.f32 %v2268, 0.0
    %v2274 = vmax.f32 %v2269, 0.0
    %v2275 = vmax.f32 %v2270, 0.0
    %v2276 = vld [vmem:[%s10] sm:$0xff]
    %v2277 = vld [vmem:[%s10 + $0x8] sm:$0xff]
    %v2278 = vld [vmem:[%s10 + $0x10] sm:$0xff]
    %v2279 = vld [vmem:[%s10 + $0x18] sm:$0xff]
    %v2280 = vld [vmem:[%s10 + $0x20] sm:$0xff]
    %v2281 = vld [vmem:[%s10 + $0x28] sm:$0xff]
    %v2282 = vld [vmem:[%s10 + $0x30] sm:$0xff]
    %v2283 = vld [vmem:[%s10 + $0x38] sm:$0xff]
    %v2284 = vld [vmem:[%s10 + $0x40] sm:$0xff]
    %v2285 = vld [vmem:[%s10 + $0x48] sm:$0xff]
    %v2286 = vld [vmem:[%s10 + $0x50] sm:$0xff]
    %v2287 = vld [vmem:[%s10 + $0x58] sm:$0xff]
    %v2288 = vld [vmem:[%s10 + $0x60] sm:$0xff]
    %v2289 = vld [vmem:[%s10 + $0x68] sm:$0xff]
    %v2290 = vld [vmem:[%s10 + $0x70] sm:$0xff]
    %v2291 = vld [vmem:[%s10 + $0x78] sm:$0xff]
    %v2292 = vld [vmem:[%s10 + $0x80] sm:$0xff]
    %v2293 = vld [vmem:[%s10 + $0x88] sm:$0xff]
    %v2294 = vld [vmem:[%s10 + $0x90] sm:$0xff]
    %v2295 = vld [vmem:[%s10 + $0x98] sm:$0xff]
    %v2296 = vld [vmem:[%s10 + $0xa0] sm:$0xff]
    %v2297 = vld [vmem:[%s10 + $0xa8] sm:$0xff]
    %v2298 = vld [vmem:[%s10 + $0xb0] sm:$0xff]
    %v2299 = vld [vmem:[%s10 + $0xb8] sm:$0xff]
    %v2300 = vld [vmem:[%s10 + $0xc0] sm:$0xff]
    %v2301 = vld [vmem:[%s10 + $0xc8] sm:$0xff]
    %v2302 = vld [vmem:[%s10 + $0xd0] sm:$0xff]
    %v2303 = vld [vmem:[%s10 + $0xd8] sm:$0xff]
    %v2304 = vld [vmem:[%s10 + $0xe0] sm:$0xff]
    %v2305 = vld [vmem:[%s10 + $0xe8] sm:$0xff]
    %v2306 = vld [vmem:[%s10 + $0xf0] sm:$0xff]
    %v2307 = vld [vmem:[%s10 + $0xf8] sm:$0xff]
    %v2308 = vld [vmem:[%s10 + $0x100] sm:$0xff]
    %v2309 = vld [vmem:[%s10 + $0x108] sm:$0xff]
    %v2310 = vld [vmem:[%s10 + $0x110] sm:$0xff]
    %v2311 = vld [vmem:[%s10 + $0x118] sm:$0xff]
    %v2312 = vld [vmem:[%s10 + $0x120] sm:$0xff]
    %v2313 = vld [vmem:[%s10 + $0x128] sm:$0xff]
    %v2314 = vld [vmem:[%s10 + $0x130] sm:$0xff]
    %v2315 = vld [vmem:[%s10 + $0x138] sm:$0xff]
    %v2316 = vld [vmem:[%s10 + $0x140] sm:$0xff]
    %v2317 = vld [vmem:[%s10 + $0x148] sm:$0xff]
    %v2318 = vld [vmem:[%s10 + $0x150] sm:$0xff]
    %v2319 = vld [vmem:[%s10 + $0x158] sm:$0xff]
    %v2320 = vld [vmem:[%s10 + $0x160] sm:$0xff]
    %v2321 = vld [vmem:[%s10 + $0x168] sm:$0xff]
    %v2322 = vld [vmem:[%s10 + $0x170] sm:$0xff]
    %v2323 = vld [vmem:[%s10 + $0x178] sm:$0xff]
    %v2324 = vld [vmem:[%s10 + $0x180] sm:$0xff]
    %v2325 = vld [vmem:[%s10 + $0x188] sm:$0xff]
    %v2326 = vld [vmem:[%s10 + $0x190] sm:$0xff]
    %v2327 = vld [vmem:[%s10 + $0x198] sm:$0xff]
    %v2328 = vld [vmem:[%s10 + $0x1a0] sm:$0xff]
    %v2329 = vld [vmem:[%s10 + $0x1a8] sm:$0xff]
    %v2330 = vld [vmem:[%s10 + $0x1b0] sm:$0xff]
    %v2331 = vld [vmem:[%s10 + $0x1b8] sm:$0xff]
    %v2332 = vld [vmem:[%s10 + $0x1c0] sm:$0xff]
    %v2333 = vld [vmem:[%s10 + $0x1c8] sm:$0xff]
    %v2334 = vld [vmem:[%s10 + $0x1d0] sm:$0xff]
    %v2335 = vld [vmem:[%s10 + $0x1d8] sm:$0xff]
    %v2336 = vld [vmem:[%s10 + $0x1e0] sm:$0xff]
    %v2337 = vld [vmem:[%s10 + $0x1e8] sm:$0xff]
    %v2338 = vld [vmem:[%s10 + $0x1f0] sm:$0xff]
    %v2339 = vld [vmem:[%s10 + $0x1f8] sm:$0xff]
    %v2340 = vld [vmem:[%s10 + $0x200] sm:$0xff]
    %v2341 = vld [vmem:[%s10 + $0x208] sm:$0xff]
    %v2342 = vld [vmem:[%s10 + $0x210] sm:$0xff]
    %v2343 = vld [vmem:[%s10 + $0x218] sm:$0xff]
    %v2344 = vld [vmem:[%s10 + $0x220] sm:$0xff]
    %v2345 = vld [vmem:[%s10 + $0x228] sm:$0xff]
    %v2346 = vld [vmem:[%s10 + $0x230] sm:$0xff]
    %v2347 = vld [vmem:[%s10 + $0x238] sm:$0xff]
    %v2348 = vld [vmem:[%s10 + $0x240] sm:$0xff]
    %v2349 = vld [vmem:[%s10 + $0x248] sm:$0xff]
    %v2350 = vld [vmem:[%s10 + $0x250] sm:$0xff]
    %v2351 = vld [vmem:[%s10 + $0x258] sm:$0xff]
    %v2352 = vld [vmem:[%s10 + $0x260] sm:$0xff]
    %v2353 = vld [vmem:[%s10 + $0x268] sm:$0xff]
    %v2354 = vld [vmem:[%s10 + $0x270] sm:$0x1]
    %v2355 = vld [vmem:[%s11] sm:$0x1]
    %v2357 = vlaneseq
    %v2358 = vshrl.u32 %v2357, 7
    %v2359 = vsub.s32 0, %v2358
    %v2360 = vrot.slane %v2355, %v2359
    %vm2362 = vcmask 924672
    %v2364 = vsel %vm2362, %v2275, 0
    %vm2366 = vcmask 1040384
    %v2368 = vsel %vm2366, %v2354, 0
    %2370 = vmatprep.subr.mxu0 0.0
    %2371 = vmatpush1.msra.mxu0 %v2276
    %2372 = vmatprep.subr.mxu0 0.0
    %2373 = vmatpush1.msra.mxu0 %v2277
    %2374 = vmatprep.subr.mxu0 0.0
    %2375 = vmatpush1.msra.mxu0 %v2278
    %2376 = vmatprep.subr.mxu0 0.0
    %2377 = vmatpush1.msra.mxu0 %v2279
    %2378 = vmatprep.subr.mxu0 0.0
    %2379 = vmatpush1.msra.mxu0 %v2280
    %2380 = vmatprep.subr.mxu0 0.0
    %2381 = vmatpush1.msra.mxu0 %v2281
    %2382 = vmatprep.subr.mxu0 0.0
    %2383 = vmatpush1.msra.mxu0 %v2282
    %2384 = vmatprep.subr.mxu0 0.0
    %2385 = vmatpush1.msra.mxu0 %v2283
    %2386 = vmatprep.subr.mxu0 0.0
    %2387 = vmatpush1.msra.mxu0 %v2284
    %2388 = vmatprep.subr.mxu0 0.0
    %2389 = vmatpush1.msra.mxu0 %v2285
    %2390 = vmatprep.subr.mxu0 0.0
    %2391 = vmatpush1.msra.mxu0 %v2286
    %2392 = vmatprep.subr.mxu0 0.0
    %2393 = vmatpush1.msra.mxu0 %v2287
    %2394 = vmatprep.subr.mxu0 0.0
    %2395 = vmatpush1.msra.mxu0 %v2288
    %2396 = vmatprep.subr.mxu0 0.0
    %2397 = vmatpush1.msra.mxu0 %v2289
    %2398 = vmatprep.subr.mxu0 0.0
    %2399 = vmatpush1.msra.mxu0 %v2290
    %2400 = vmatprep.subr.mxu0 0.0
    %2401 = vmatpush1.msra.mxu0 %v2291
    %2402 = vmatprep.subr.mxu0 0.0
    %2403 = vmatpush1.msra.mxu0 %v2292
    %2404 = vmatprep.subr.mxu0 0.0
    %2405 = vmatpush1.msra.mxu0 %v2293
    %2406 = vmatprep.subr.mxu0 0.0
    %2407 = vmatpush1.msra.mxu0 %v2294
    %2408 = vmatprep.subr.mxu0 0.0
    %2409 = vmatpush1.msra.mxu0 %v2295
    %2410 = vmatprep.subr.mxu0 0.0
    %2411 = vmatpush1.msra.mxu0 %v2296
    %2412 = vmatprep.subr.mxu0 0.0
    %2413 = vmatpush1.msra.mxu0 %v2297
    %2414 = vmatprep.subr.mxu0 0.0
    %2415 = vmatpush1.msra.mxu0 %v2298
    %2416 = vmatprep.subr.mxu0 0.0
    %2417 = vmatpush1.msra.mxu0 %v2299
    %2418 = vmatprep.subr.mxu0 0.0
    %2419 = vmatpush1.msra.mxu0 %v2300
    %2420 = vmatprep.subr.mxu0 0.0
    %2421 = vmatpush1.msra.mxu0 %v2301
    %2422 = vmatprep.subr.mxu0 0.0
    %2423 = vmatpush1.msra.mxu0 %v2302
    %2424 = vmatprep.subr.mxu0 0.0
    %2425 = vmatpush1.msra.mxu0 %v2303
    %2426 = vmatprep.subr.mxu0 0.0
    %2427 = vmatpush1.msra.mxu0 %v2304
    %2428 = vmatprep.subr.mxu0 0.0
    %2429 = vmatpush1.msra.mxu0 %v2305
    %2430 = vmatprep.subr.mxu0 0.0
    %2431 = vmatpush1.msra.mxu0 %v2306
    %2432 = vmatprep.subr.mxu0 0.0
    %2433 = vmatpush1.msra.mxu0 %v2307
    %2434 = vmatprep.mubr.f32.mxu0 %v2272
    %2435 = vmatmul.mubr.f32.gmra.mrb[0].mxu0 %v2271
    %v2436 = vpop.f32.mrb[0].mxu0
    %v2437 = vadd.f32 %v2360, %v2436
    %v2438 = vpop.f32.mrb[0].mxu0
    %2439 = vdwg.mxu0
    %2440 = vmatprep.subr.mxu0 0.0
    %2441 = vmatpush1.msra.mxu0 %v2308
    %2442 = vmatprep.subr.mxu0 0.0
    %2443 = vmatpush1.msra.mxu0 %v2309
    %2444 = vmatprep.subr.mxu0 0.0
    %2445 = vmatpush1.msra.mxu0 %v2310
    %2446 = vmatprep.subr.mxu0 0.0
    %2447 = vmatpush1.msra.mxu0 %v2311
    %2448 = vmatprep.subr.mxu0 0.0
    %2449 = vmatpush1.msra.mxu0 %v2312
    %2450 = vmatprep.subr.mxu0 0.0
    %2451 = vmatpush1.msra.mxu0 %v2313
    %2452 = vmatprep.subr.mxu0 0.0
    %2453 = vmatpush1.msra.mxu0 %v2314
    %2454 = vmatprep.subr.mxu0 0.0
    %2455 = vmatpush1.msra.mxu0 %v2315
    %2456 = vmatprep.subr.mxu0 0.0
    %2457 = vmatpush1.msra.mxu0 %v2316
    %2458 = vmatprep.subr.mxu0 0.0
    %2459 = vmatpush1.msra.mxu0 %v2317
    %2460 = vmatprep.subr.mxu0 0.0
    %2461 = vmatpush1.msra.mxu0 %v2318
    %2462 = vmatprep.subr.mxu0 0.0
    %2463 = vmatpush1.msra.mxu0 %v2319
    %2464 = vmatprep.subr.mxu0 0.0
    %2465 = vmatpush1.msra.mxu0 %v2320
    %2466 = vmatprep.subr.mxu0 0.0
    %2467 = vmatpush1.msra.mxu0 %v2321
    %2468 = vmatprep.subr.mxu0 0.0
    %2469 = vmatpush1.msra.mxu0 %v2322
    %2470 = vmatprep.subr.mxu0 0.0
    %2471 = vmatpush1.msra.mxu0 %v2323
    %2472 = vmatprep.subr.mxu0 0.0
    %2473 = vmatpush1.msra.mxu0 %v2324
    %2474 = vmatprep.subr.mxu0 0.0
    %2475 = vmatpush1.msra.mxu0 %v2325
    %2476 = vmatprep.subr.mxu0 0.0
    %2477 = vmatpush1.msra.mxu0 %v2326
    %2478 = vmatprep.subr.mxu0 0.0
    %2479 = vmatpush1.msra.mxu0 %v2327
    %2480 = vmatprep.subr.mxu0 0.0
    %2481 = vmatpush1.msra.mxu0 %v2328
    %2482 = vmatprep.subr.mxu0 0.0
    %2483 = vmatpush1.msra.mxu0 %v2329
    %2484 = vmatprep.subr.mxu0 0.0
    %2485 = vmatpush1.msra.mxu0 %v2330
    %2486 = vmatprep.subr.mxu0 0.0
    %2487 = vmatpush1.msra.mxu0 %v2331
    %2488 = vmatprep.subr.mxu0 0.0
    %2489 = vmatpush1.msra.mxu0 %v2332
    %2490 = vmatprep.subr.mxu0 0.0
    %2491 = vmatpush1.msra.mxu0 %v2333
    %2492 = vmatprep.subr.mxu0 0.0
    %2493 = vmatpush1.msra.mxu0 %v2334
    %2494 = vmatprep.subr.mxu0 0.0
    %2495 = vmatpush1.msra.mxu0 %v2335
    %2496 = vmatprep.subr.mxu0 0.0
    %2497 = vmatpush1.msra.mxu0 %v2336
    %2498 = vmatprep.subr.mxu0 0.0
    %2499 = vmatpush1.msra.mxu0 %v2337
    %2500 = vmatprep.subr.mxu0 0.0
    %2501 = vmatpush1.msra.mxu0 %v2338
    %2502 = vmatprep.subr.mxu0 0.0
    %2503 = vmatpush1.msra.mxu0 %v2339
    %2504 = vmatprep.mubr.f32.mxu0 %v2274
    %2505 = vmatmul.mubr.f32.gmra.mrb[0].mxu0 %v2273
    %v2506 = vpop.f32.mrb[0].mxu0
    %v2507 = vadd.f32 %v2437, %v2506
    %v2508 = vpop.f32.mrb[0].mxu0
    %2509 = vdwg.mxu0
    %2510 = vmatprep.subr.mxu0 0.0
    %2511 = vmatpush1.msra.mxu0 %v2340
    %2512 = vmatprep.subr.mxu0 0.0
    %2513 = vmatpush1.msra.mxu0 %v2341
    %2514 = vmatprep.subr.mxu0 0.0
    %2515 = vmatpush1.msra.mxu0 %v2342
    %2516 = vmatprep.subr.mxu0 0.0
    %2517 = vmatpush1.msra.mxu0 %v2343
    %2518 = vmatprep.subr.mxu0 0.0
    %2519 = vmatpush1.msra.mxu0 %v2344
    %2520 = vmatprep.subr.mxu0 0.0
    %2521 = vmatpush1.msra.mxu0 %v2345
    %2522 = vmatprep.subr.mxu0 0.0
    %2523 = vmatpush1.msra.mxu0 %v2346
    %2524 = vmatprep.subr.mxu0 0.0
    %2525 = vmatpush1.msra.mxu0 %v2347
    %2526 = vmatprep.subr.mxu0 0.0
    %2527 = vmatpush1.msra.mxu0 %v2348
    %2528 = vmatprep.subr.mxu0 0.0
    %2529 = vmatpush1.msra.mxu0 %v2349
    %2530 = vmatprep.subr.mxu0 0.0
    %2531 = vmatpush1.msra.mxu0 %v2350
    %2532 = vmatprep.subr.mxu0 0.0
    %2533 = vmatpush1.msra.mxu0 %v2351
    %2534 = vmatprep.subr.mxu0 0.0
    %2535 = vmatpush1.msra.mxu0 %v2352
    %2536 = vmatprep.subr.mxu0 0.0
    %2537 = vmatpush1.msra.mxu0 %v2353
    %2538 = vmatprep.subr.mxu0 0.0
    %2539 = vmatpush1.msra.mxu0 %v2368
    %2540 = vmatprep.subr.mxu0 0.0
    %2541 = vmatpush1.msra.mxu0 0.0
    %2542 = vmatprep.subr.mxu0 0.0
    %2543 = vmatpush1.msra.mxu0 0.0
    %2544 = vmatprep.subr.mxu0 0.0
    %2545 = vmatpush1.msra.mxu0 0.0
    %2546 = vmatprep.subr.mxu0 0.0
    %2547 = vmatpush1.msra.mxu0 0.0
    %2548 = vmatprep.subr.mxu0 0.0
    %2549 = vmatpush1.msra.mxu0 0.0
    %2550 = vmatprep.subr.mxu0 0.0
    %2551 = vmatpush1.msra.mxu0 0.0
    %2552 = vmatprep.subr.mxu0 0.0
    %2553 = vmatpush1.msra.mxu0 0.0
    %2554 = vmatprep.subr.mxu0 0.0
    %2555 = vmatpush1.msra.mxu0 0.0
    %2556 = vmatprep.subr.mxu0 0.0
    %2557 = vmatpush1.msra.mxu0 0.0
    %2558 = vmatprep.subr.mxu0 0.0
    %2559 = vmatpush1.msra.mxu0 0.0
    %2560 = vmatprep.subr.mxu0 0.0
    %2561 = vmatpush1.msra.mxu0 0.0
    %2562 = vmatprep.subr.mxu0 0.0
    %2563 = vmatpush1.msra.mxu0 0.0
    %2564 = vmatprep.subr.mxu0 0.0
    %2565 = vmatpush1.msra.mxu0 0.0
    %2566 = vmatprep.subr.mxu0 0.0
    %2567 = vmatpush1.msra.mxu0 0.0
    %2568 = vmatprep.subr.mxu0 0.0
    %2569 = vmatpush1.msra.mxu0 0.0
    %2570 = vmatprep.subr.mxu0 0.0
    %2571 = vmatpush1.msra.mxu0 0.0
    %2572 = vmatprep.subr.mxu0 0.0
    %2573 = vmatpush1.msra.mxu0 0.0
    %2574 = vmatprep.mubr.f32.mxu0 0.0
    %2575 = vmatmul.mubr.f32.gmra.mrb[0].mxu0 %v2364
    %v2576 = vpop.f32.mrb[0].mxu0
    %v2577 = vadd.f32 %v2507, %v2576
    %v2578 = vpop.f32.mrb[0].mxu0
    %2579 = vdwg.mxu0
    %2580 = vst [vmem:[#allocation4] sm:$0xff] %v2577
    // Predicated region
    $region50: #{tpu_custom_call.1} parent=1 // pred_check
      _
    $region51: #{tpu_custom_call.1} parent=1 // pred_check_branch
      %2582 = sbr.rel (0) target = $region53
    $region52: #{tpu_custom_call.1} parent=1 // pred_region
      %s2584 = ssub.s32 128, 128
      %2585 = vsyncadd [#allocation5], %s2584
      %s2587 = sshll.u32 [#allocation4], 4
      %s2588 = int_to_ptr.vmem [resolvable:$true] %s2587
      %2590 = dma.vmem_to_hbm [thread:$0]  %s2588, 128, %s12, [#allocation5]
    $region53: #{tpu_custom_call.1} parent=1 // pred_fallthru
      _
    // Predicated region
    $region54: #{tpu_custom_call.1} parent=1 // pred_check
      _
    $region55: #{tpu_custom_call.1} parent=1 // pred_check_branch
      %2592 = sbr.rel (0) target = $region57
    $region56: #{tpu_custom_call.1} parent=1 // pred_region
      %2593 = dma.done [#allocation5], 128
    $region57: #{tpu_custom_call.1} parent=1 // pred_fallthru
      _
    %2594 = vsyncpa [#allocation5], 1

</llo_original>
